<compile_context>
chip_gen: v6e
topology: v6e:2x2x1
jax: 0.10.0
libtpu: 0.0.40
codegen_flags: <defaults>
</compile_context>

<pallas_src>
import functools

import jax
import jax.numpy as jnp
from jax import lax
from jax.experimental import pallas as pl
from jax.experimental.pallas import tpu as pltpu


def _round_up(n, m):
    return ((n + m - 1) // m) * m


def _layernorm(x, g, b, eps=1e-5):
    # PyTorch LayerNorm semantics: biased variance, eps=1e-5, computed in float32.
    x = x.astype(jnp.float32)
    mu = jnp.mean(x, axis=-1, keepdims=True)
    var = jnp.mean(jnp.square(x - mu), axis=-1, keepdims=True)
    return (x - mu) * lax.rsqrt(var + eps) * g + b


def _spec(shape, index_map, buffers=None):
    """BlockSpec helper; buffers=1 single-buffers a resident (constant-index) operand."""
    if buffers is not None:
        try:
            return pl.BlockSpec(shape, index_map, pipeline_mode=pl.Buffered(buffers))
        except (TypeError, AttributeError):
            pass  # older/newer API without pipeline_mode: fall back to default buffering
    return pl.BlockSpec(shape, index_map)


def _resident(arr, grid_rank):
    """Whole-array, constant-index, single-buffered spec for weights/biases."""
    nd = arr.ndim
    if grid_rank == 2:
        imap = lambda b, i, _nd=nd: (0,) * _nd
    else:
        imap = lambda b, i, c, _nd=nd: (0,) * _nd
    return _spec(arr.shape, imap, buffers=1)


# --------------------------- kernel A: LN1 + fused QKV projection ---------------------------
def _ln_qkv_kernel(n_head, x_ref, ln_g_ref, ln_b_ref, wqkv_ref, bqkv_ref,
                   q_ref, kt_ref, v_ref):
    tt, D = x_ref.shape
    Dh = D // n_head

    xn = _layernorm(x_ref[...], ln_g_ref[...], ln_b_ref[...])
    # One full-width (D, 3D) MXU call; Dh**-0.25 scaling already folded into q/k weights.
    qkv_f = jnp.dot(xn.astype(jnp.bfloat16), wqkv_ref[...],
                    preferred_element_type=jnp.float32) + bqkv_ref[...]       # (tt, 3D) f32

    # Q: one lane-dense (tt, D) store (head h occupies columns h*Dh:(h+1)*Dh).
    q_ref[...] = qkv_f[:, :D].astype(jnp.bfloat16)

    # K: head-major *transposed* (Dh, tt) so the lane dim is the sequence -> dense stores here
    # and a plain (tq,Dh)x(Dh,T) NN matmul in the attention kernel.
    k_t = qkv_f[:, D:2 * D].T                                                 # (D, tt) f32
    for h in range(n_head):
        kt_ref[h] = k_t[h * Dh:(h + 1) * Dh, :].astype(jnp.bfloat16)

    # V: head-major (tt, Dh) so w@v stays an NN matmul.
    v_bf = qkv_f[:, 2 * D:].astype(jnp.bfloat16)
    for h in range(n_head):
        v_ref[h] = v_bf[:, h * Dh:(h + 1) * Dh]


# ------ kernel B: attention + out-proj + residual + LN2 + hidden-chunk-streamed MLP ---------
def _attn_mlp_kernel(n_head, t_real, n_chunks,
                     x_ref, q_ref, kt_ref, v_ref, wo_ref, bo_ref,
                     ln2_g_ref, ln2_b_ref, w1_ref, b1_ref, w2_ref, b2_ref,
                     o_ref, q_scr, wv_scr, attn_scr, xn2_scr, acc_scr):
    c = pl.program_id(2)
    tq, D = x_ref.shape
    Dh = D // n_head
    t_pad = kt_ref.shape[-1]

    # ---- chunk 0: attention of this q tile vs the full K/V context, residual, LN2 ----
    @pl.when(c == 0)
    def _attention_and_ln2():
        # Head-split Q once per tile (static lane slices, layout only, VMEM-local).
        for h in range(n_head):
            q_scr[h] = q_ref[:, h * Dh:(h + 1) * Dh]

        # Key-padding mask (only when T was padded up to t_pad).
        if t_pad > t_real:
            col = lax.broadcasted_iota(jnp.int32, (1, t_pad), 1)
            key_bias = jnp.where(col < t_real, 0.0, -1e30).astype(jnp.float32)
        else:
            key_bias = None

        def head_body(h, carry):
            # (tq, Dh) x (Dh, T) NN matmul; operands pre-scaled by Dh**-0.25.
            qk = jnp.dot(q_scr[h], kt_ref[h], preferred_element_type=jnp.float32)
            if key_bias is not None:
                qk = qk + key_bias
            m = jnp.max(qk, axis=-1, keepdims=True)
            p = jnp.exp(qk - m)
            l = jnp.sum(p, axis=-1, keepdims=True)
            w = p * pl.reciprocal(l, approx=True)      # softmax divide on the EUP slot
            wv_scr[h] = jnp.dot(w.astype(jnp.bfloat16), v_ref[h],
                                preferred_element_type=jnp.float32).astype(jnp.bfloat16)
            return carry

        # fori_loop (not an unrolled Python loop) bounds liveness to one head's (tq, T) scores.
        lax.fori_loop(0, n_head, head_body, 0)

        # Gather heads into a lane-major (tq, D) buffer so the out-projection is ONE K=D matmul.
        for h in range(n_head):
            attn_scr[:, h * Dh:(h + 1) * Dh] = wv_scr[h]

        attn_out = jnp.dot(attn_scr[...], wo_ref[...],
                           preferred_element_type=jnp.float32) + bo_ref[...]
        y = x_ref[...].astype(jnp.float32) + attn_out                  # residual 1
        xn2_scr[...] = _layernorm(y, ln2_g_ref[...], ln2_b_ref[...]).astype(jnp.bfloat16)
        # Fold residual 2 and the final MLP bias into the accumulator init.
        acc_scr[...] = y + b2_ref[...]

    # ---- every chunk: one streamed (D, mlp_chunk) x (mlp_chunk, D) slice of the MLP ----
    h1 = jnp.dot(xn2_scr[...], w1_ref[...],
                 preferred_element_type=jnp.float32) + b1_ref[...]
    h1 = jax.nn.gelu(h1, approximate=False)            # exact erf-GELU (nn.GELU default)
    acc_scr[...] += jnp.dot(h1.astype(jnp.bfloat16), w2_ref[...],
                            preferred_element_type=jnp.float32)

    @pl.when(c == n_chunks - 1)
    def _write_out():
        o_ref[...] = acc_scr[...].astype(o_ref.dtype)


# ------------------------------------------ wrapper -----------------------------------------
def _default_vmem_limit_bytes():
    # ~75% of physical VMEM per core: ~48 MiB on v7x (64 MiB/TC), ~96 MiB on v5e/v6e (128 MiB).
    try:
        cap = int(pltpu.get_tpu_info().vmem_capacity_bytes)
        return min(max(cap * 3 // 4, 32 * 1024 * 1024), 112 * 1024 * 1024)
    except Exception:
        return 64 * 1024 * 1024


def residual_attention_block(x, params, n_head, *, q_tile=None, mlp_chunk=None,
                             vmem_limit_bytes=None, donate_x=False):
    """Forward pass of ResidualAttentionBlock.  x: (B, T, D) float32.

    donate_x=True aliases x's HBM buffer to the output (x must not be reused afterwards).
    """
    # TODO(synk): mask / kv_cache / cross-attention paths of the PyTorch module are not
    # implemented (the module under test uses cross_attention=False, mask=None).
    B, T, D = x.shape
    H = n_head
    assert D % H == 0
    Dh = D // H
    M = params["w1"].shape[1]

    if vmem_limit_bytes is None:
        vmem_limit_bytes = _default_vmem_limit_bytes()

    # MXU-shaped sequence tile; pad T up to a multiple of it (padded keys masked in-kernel).
    if q_tile is None:
        q_tile = 256 if T > 256 else _round_up(T, 8)
    T_pad = _round_up(T, q_tile)
    if T_pad > q_tile and q_tile % 128 != 0:
        raise ValueError("q_tile must be a multiple of 128 when the sequence is tiled")
    if mlp_chunk is None:
        mlp_chunk = 512 if M % 512 == 0 else M
    assert M % mlp_chunk == 0 and (mlp_chunk % 128 == 0 or mlp_chunk == M)
    n_seq = T_pad // q_tile
    n_chunks = M // mlp_chunk

    f32, bf16 = jnp.float32, jnp.bfloat16
    scale = float(Dh) ** -0.25

    # Host-side weight prep: fuse Q|K|V into one (D, 3D) weight, fold Dh**-0.25 into q/k,
    # cast matmul weights to bf16 (f32 accumulation in-kernel).
    wqkv = jnp.concatenate(
        [params["wq"] * scale, params["wk"] * scale, params["wv"]], axis=1).astype(bf16)
    bqkv = jnp.concatenate(
        [params["bq"] * scale, jnp.zeros((1, D), f32), params["bv"]], axis=1).astype(f32)
    wo = params["wo"].astype(bf16)
    w1 = params["w1"].astype(bf16)
    w2 = params["w2"].astype(bf16)

    x_p = x if T_pad == T else jnp.pad(x, ((0, 0), (0, T_pad - T), (0, 0)))

    cparams_a = pltpu.CompilerParams(
        dimension_semantics=("parallel", "parallel"), vmem_limit_bytes=vmem_limit_bytes)
    cparams_b = pltpu.CompilerParams(
        dimension_semantics=("parallel", "parallel", "arbitrary"),
        vmem_limit_bytes=vmem_limit_bytes)

    # ---- kernel A: LN1 + fused QKV -> lane-dense Q, transposed K, head-major V ----
    q, kt, v = pl.pallas_call(
        functools.partial(_ln_qkv_kernel, H),
        out_shape=[jax.ShapeDtypeStruct((B, T_pad, D), bf16),
                   jax.ShapeDtypeStruct((B, H, Dh, T_pad), bf16),
                   jax.ShapeDtypeStruct((B, H, T_pad, Dh), bf16)],
        grid_spec=pltpu.PrefetchScalarGridSpec(
            num_scalar_prefetch=0,
            grid=(B, n_seq),
            in_specs=[
                pl.BlockSpec((None, q_tile, D), lambda b, i: (b, i, 0)),
                _resident(params["ln1_g"], 2), _resident(params["ln1_b"], 2),
                _resident(wqkv, 2), _resident(bqkv, 2),
            ],
            out_specs=[
                pl.BlockSpec((None, q_tile, D), lambda b, i: (b, i, 0)),
                pl.BlockSpec((None, H, Dh, q_tile), lambda b, i: (b, 0, 0, i)),
                pl.BlockSpec((None, H, q_tile, Dh), lambda b, i: (b, 0, i, 0)),
            ]),
        compiler_params=cparams_a,
    )(x_p, params["ln1_g"], params["ln1_b"], wqkv, bqkv)

    # K/V context blocks only change at batch boundaries; single-buffer them when VMEM is
    # tight (v7x) to halve their residency, keep double-buffering on 128 MiB parts.
    kv_bufs = 1 if vmem_limit_bytes < (80 << 20) else None

    # ---- kernel B: attention + out-proj + residual + LN2 + streamed MLP + residual ----
    out = pl.pallas_call(
        functools.partial(_attn_mlp_kernel, H, T, n_chunks),
        out_shape=jax.ShapeDtypeStruct((B, T_pad, D), x.dtype),
        grid_spec=pltpu.PrefetchScalarGridSpec(
            num_scalar_prefetch=0,
            grid=(B, n_seq, n_chunks),
            in_specs=[
                pl.BlockSpec((None, q_tile, D), lambda b, i, c: (b, i, 0)),      # x tile
                pl.BlockSpec((None, q_tile, D), lambda b, i, c: (b, i, 0)),      # q tile
                _spec((None, H, Dh, T_pad), lambda b, i, c: (b, 0, 0, 0), kv_bufs),  # K^T ctx
                _spec((None, H, T_pad, Dh), lambda b, i, c: (b, 0, 0, 0), kv_bufs),  # V ctx
                _resident(wo, 3), _resident(params["bo"], 3),
                _resident(params["ln2_g"], 3), _resident(params["ln2_b"], 3),
                pl.BlockSpec((D, mlp_chunk), lambda b, i, c: (0, c)),            # w1 chunk
                pl.BlockSpec((1, mlp_chunk), lambda b, i, c: (0, c)),            # b1 chunk
                pl.BlockSpec((mlp_chunk, D), lambda b, i, c: (c, 0)),            # w2 chunk
                _resident(params["b2"], 3),
            ],
            out_specs=pl.BlockSpec((None, q_tile, D), lambda b, i, c: (b, i, 0)),
            scratch_shapes=[
                pltpu.VMEM((H, q_tile, Dh), bf16),   # head-split Q
                pltpu.VMEM((H, q_tile, Dh), bf16),   # per-head attention output
                pltpu.VMEM((q_tile, D), bf16),       # gathered attention output (lane-major)
                pltpu.VMEM((q_tile, D), bf16),       # LN2(x + attn) reused by every MLP chunk
                pltpu.VMEM((q_tile, D), f32),        # residual-2 / MLP accumulator
            ]),
        input_output_aliases=({0: 0} if donate_x else {}),
        compiler_params=cparams_b,
    )(x_p, q, kt, v, wo, params["bo"], params["ln2_g"], params["ln2_b"],
      w1, params["b1"], w2, params["b2"])

    return out if T_pad == T else out[:, :T, :]


# --------------------------------------- test helpers ---------------------------------------
def _init_params(key, n_state, n_head):
    D = n_state
    M = 4 * n_state
    keys = jax.random.split(key, 8)
    s = 0.02

    def w(k, shape):
        return (s * jax.random.normal(k, shape)).astype(jnp.float32)

    return {
        "ln1_g": jnp.ones((1, D), jnp.float32),
        "ln1_b": jnp.zeros((1, D), jnp.float32),
        "wq": w(keys[0], (D, D)),
        "bq": w(keys[1], (1, D)),
        "wk": w(keys[2], (D, D)),
        "wv": w(keys[3], (D, D)),
        "bv": w(keys[4], (1, D)),
        "wo": w(keys[5], (D, D)),
        "bo": jnp.zeros((1, D), jnp.float32),
        "ln2_g": jnp.ones((1, D), jnp.float32),
        "ln2_b": jnp.zeros((1, D), jnp.float32),
        "w1": w(keys[6], (D, M)),
        "b1": jnp.zeros((1, M), jnp.float32),
        "w2": w(keys[7], (M, D)),
        "b2": jnp.zeros((1, D), jnp.float32),
    }


def _reference(x, p, n_head):
    """Pure-JAX f32 reference mirroring the PyTorch forward (mask=None, no cross-attn)."""
    B, T, D = x.shape
    Dh = D // n_head
    scale = float(Dh) ** -0.25

    xn = _layernorm(x, p["ln1_g"], p["ln1_b"])
    q = xn @ p["wq"] + p["bq"]
    k = xn @ p["wk"]
    v = xn @ p["wv"] + p["bv"]
    q = (q.reshape(B, T, n_head, Dh).transpose(0, 2, 1, 3)) * scale
    k = (k.reshape(B, T, n_head, Dh).transpose(0, 2, 3, 1)) * scale
    v = v.reshape(B, T, n_head, Dh).transpose(0, 2, 1, 3)
    w = jax.nn.softmax(q @ k, axis=-1)
    wv = (w @ v).transpose(0, 2, 1, 3).reshape(B, T, D)
    x = x + wv @ p["wo"] + p["bo"]

    xn2 = _layernorm(x, p["ln2_g"], p["ln2_b"])
    h = jax.nn.gelu(xn2 @ p["w1"] + p["b1"], approximate=False)
    return x + h @ p["w2"] + p["b2"]


if __name__ == "__main__":
    # T=250 (not a multiple of the tile) exercises the padding + key-masking path;
    # q_tile=128 / mlp_chunk=128 exercise the seq-tiling and hidden-chunk grid axes.
    B, T, D, H = 2, 250, 64, 4
    key = jax.random.PRNGKey(0)
    kx, kp = jax.random.split(key)
    x = jax.random.normal(kx, (B, T, D), dtype=jnp.float32)
    params = _init_params(kp, D, H)

    ref = jax.block_until_ready(_reference(x, params, H))

    out = residual_attention_block(x, params, H, q_tile=128, mlp_chunk=128)
    out = jax.block_until_ready(out)

    assert out.shape == (B, T, D)
    # bf16 matmuls + approx reciprocal -> loosened tolerance vs the f32 reference.
    assert jnp.allclose(out, ref, atol=2e-2, rtol=2e-2), "mismatch vs reference"
    print("KERNEL_OK")
</pallas_src>

<mosaic_0001>
module attributes {stable_mosaic.version = 11 : i64} {
  func.func @_ln_qkv_kernel(%arg0: i32, %arg1: i32, %arg2: memref<1x128x64xf32, #tpu.memory_space<vmem>>, %arg3: memref<1x64xf32, #tpu.memory_space<vmem>>, %arg4: memref<1x64xf32, #tpu.memory_space<vmem>>, %arg5: memref<64x192xbf16, #tpu.memory_space<vmem>>, %arg6: memref<1x192xf32, #tpu.memory_space<vmem>>, %arg7: memref<1x128x64xbf16, #tpu.memory_space<vmem>>, %arg8: memref<1x4x16x128xbf16, #tpu.memory_space<vmem>>, %arg9: memref<1x4x128x16xbf16, #tpu.memory_space<vmem>>) attributes {dimension_semantics = [#tpu.dimension_semantics<parallel>, #tpu.dimension_semantics<parallel>], iteration_bounds = array<i64: 2, 2>, scalar_prefetch = 0 : i64, scratch_operands = 0 : i64, tpu.core_type = #tpu.core_type<tc>, window_params = [{transform_indices = @transform_0, window_bounds = array<i64: 1, 128, 64>}, {pipeline_mode = #tpu.pipeline_mode<synchronous>, transform_indices = @transform_1, window_bounds = array<i64: 1, 64>}, {pipeline_mode = #tpu.pipeline_mode<synchronous>, transform_indices = @transform_2, window_bounds = array<i64: 1, 64>}, {pipeline_mode = #tpu.pipeline_mode<synchronous>, transform_indices = @transform_3, window_bounds = array<i64: 64, 192>}, {pipeline_mode = #tpu.pipeline_mode<synchronous>, transform_indices = @transform_4, window_bounds = array<i64: 1, 192>}, {transform_indices = @transform_5, window_bounds = array<i64: 1, 128, 64>}, {transform_indices = @transform_6, window_bounds = array<i64: 1, 4, 16, 128>}, {transform_indices = @transform_7, window_bounds = array<i64: 1, 4, 128, 16>}]} {
    %c0 = arith.constant 0 : index
    %c0_0 = arith.constant 0 : index
    %c0_1 = arith.constant 0 : index
    %0 = vector.load %arg2[%c0, %c0_0, %c0_1] : memref<1x128x64xf32, #tpu.memory_space<vmem>>, vector<1x128x64xf32>
    %1 = vector.shape_cast %0 : vector<1x128x64xf32> to vector<128x64xf32>
    %c0_2 = arith.constant 0 : index
    %c0_3 = arith.constant 0 : index
    %2 = vector.load %arg3[%c0_2, %c0_3] : memref<1x64xf32, #tpu.memory_space<vmem>>, vector<1x64xf32>
    %c0_4 = arith.constant 0 : index
    %c0_5 = arith.constant 0 : index
    %3 = vector.load %arg4[%c0_4, %c0_5] : memref<1x64xf32, #tpu.memory_space<vmem>>, vector<1x64xf32>
    %cst = arith.constant dense<0.000000e+00> : vector<128xf32>
    %4 = vector.multi_reduction <add>, %1, %cst [1] : vector<128x64xf32> to vector<128xf32>
    %5 = vector.shape_cast %4 : vector<128xf32> to vector<128x1xf32>
    %cst_6 = arith.constant 6.400000e+01 : f32
    %6 = vector.broadcast %cst_6 : f32 to vector<128x1xf32>
    %7 = arith.divf %5, %6 : vector<128x1xf32>
    %8 = vector.broadcast %7 : vector<128x1xf32> to vector<128x64xf32>
    %9 = arith.subf %1, %8 : vector<128x64xf32>
    %10 = arith.mulf %9, %9 : vector<128x64xf32>
    %cst_7 = arith.constant dense<0.000000e+00> : vector<128xf32>
    %11 = vector.multi_reduction <add>, %10, %cst_7 [1] : vector<128x64xf32> to vector<128xf32>
    %12 = vector.shape_cast %11 : vector<128xf32> to vector<128x1xf32>
    %cst_8 = arith.constant 6.400000e+01 : f32
    %13 = vector.broadcast %cst_8 : f32 to vector<128x1xf32>
    %14 = arith.divf %12, %13 : vector<128x1xf32>
    %15 = vector.broadcast %7 : vector<128x1xf32> to vector<128x64xf32>
    %16 = arith.subf %1, %15 : vector<128x64xf32>
    %cst_9 = arith.constant 9.99999974E-6 : f32
    %17 = vector.broadcast %cst_9 : f32 to vector<128x1xf32>
    %18 = arith.addf %14, %17 : vector<128x1xf32>
    %19 = math.rsqrt %18 : vector<128x1xf32>
    %20 = vector.broadcast %19 : vector<128x1xf32> to vector<128x64xf32>
    %21 = arith.mulf %16, %20 : vector<128x64xf32>
    %22 = vector.broadcast %2 : vector<1x64xf32> to vector<128x64xf32>
    %23 = arith.mulf %21, %22 : vector<128x64xf32>
    %24 = vector.broadcast %3 : vector<1x64xf32> to vector<128x64xf32>
    %25 = arith.addf %23, %24 : vector<128x64xf32>
    %26 = arith.truncf %25 : vector<128x64xf32> to vector<128x64xbf16>
    %c0_10 = arith.constant 0 : index
    %c0_11 = arith.constant 0 : index
    %27 = vector.load %arg5[%c0_10, %c0_11] : memref<64x192xbf16, #tpu.memory_space<vmem>>, vector<64x192xbf16>
    %cst_12 = arith.constant dense<0.000000e+00> : vector<128x192xf32>
    %28 = tpu.matmul %26, %27, %cst_12 {dimension_numbers = #tpu.dot_dimension_numbers<[1], [0], [0], [1], [0, 0, 1, 1], [], []>} : vector<128x64xbf16>, vector<64x192xbf16>, vector<128x192xf32> -> vector<128x192xf32>
    %c0_13 = arith.constant 0 : index
    %c0_14 = arith.constant 0 : index
    %29 = vector.load %arg6[%c0_13, %c0_14] : memref<1x192xf32, #tpu.memory_space<vmem>>, vector<1x192xf32>
    %30 = vector.broadcast %29 : vector<1x192xf32> to vector<128x192xf32>
    %31 = arith.addf %28, %30 : vector<128x192xf32>
    %32 = vector.extract_strided_slice %31 {offsets = [0, 0], sizes = [128, 64], strides = [1, 1]} : vector<128x192xf32> to vector<128x64xf32>
    %33 = arith.truncf %32 : vector<128x64xf32> to vector<128x64xbf16>
    %c0_15 = arith.constant 0 : index
    %c0_16 = arith.constant 0 : index
    %c0_17 = arith.constant 0 : index
    %34 = vector.load %arg7[%c0_15, %c0_16, %c0_17] : memref<1x128x64xbf16, #tpu.memory_space<vmem>>, vector<1x128x64xbf16>
    %35 = vector.shape_cast %34 : vector<1x128x64xbf16> to vector<128x64xbf16>
    %36 = vector.shape_cast %33 : vector<128x64xbf16> to vector<1x128x64xbf16>
    tpu.vector_store %arg7[%c0_15, %c0_16, %c0_17], %36 {strides = array<i32>} : memref<1x128x64xbf16, #tpu.memory_space<vmem>>, vector<1x128x64xbf16>,
    %37 = vector.extract_strided_slice %31 {offsets = [0, 64], sizes = [128, 64], strides = [1, 1]} : vector<128x192xf32> to vector<128x64xf32>
    %38 = tpu.transpose %37, [1, 0] : vector<128x64xf32> -> vector<64x128xf32>
    %39 = vector.extract_strided_slice %38 {offsets = [0, 0], sizes = [16, 128], strides = [1, 1]} : vector<64x128xf32> to vector<16x128xf32>
    %40 = arith.truncf %39 : vector<16x128xf32> to vector<16x128xbf16>
    %c0_18 = arith.constant 0 : index
    %c0_19 = arith.constant 0 : index
    %c0_20 = arith.constant 0 : index
    %c0_21 = arith.constant 0 : index
    %41 = vector.load %arg8[%c0_18, %c0_19, %c0_20, %c0_21] : memref<1x4x16x128xbf16, #tpu.memory_space<vmem>>, vector<1x1x16x128xbf16>
    %42 = vector.shape_cast %41 : vector<1x1x16x128xbf16> to vector<16x128xbf16>
    %43 = vector.shape_cast %40 : vector<16x128xbf16> to vector<1x1x16x128xbf16>
    tpu.vector_store %arg8[%c0_18, %c0_19, %c0_20, %c0_21], %43 {strides = array<i32>} : memref<1x4x16x128xbf16, #tpu.memory_space<vmem>>, vector<1x1x16x128xbf16>,
    %44 = vector.extract_strided_slice %38 {offsets = [16, 0], sizes = [16, 128], strides = [1, 1]} : vector<64x128xf32> to vector<16x128xf32>
    %45 = arith.truncf %44 : vector<16x128xf32> to vector<16x128xbf16>
    %c0_22 = arith.constant 0 : index
    %c1 = arith.constant 1 : index
    %c0_23 = arith.constant 0 : index
    %c0_24 = arith.constant 0 : index
    %46 = vector.load %arg8[%c0_22, %c1, %c0_23, %c0_24] : memref<1x4x16x128xbf16, #tpu.memory_space<vmem>>, vector<1x1x16x128xbf16>
    %47 = vector.shape_cast %46 : vector<1x1x16x128xbf16> to vector<16x128xbf16>
    %48 = vector.shape_cast %45 : vector<16x128xbf16> to vector<1x1x16x128xbf16>
    tpu.vector_store %arg8[%c0_22, %c1, %c0_23, %c0_24], %48 {strides = array<i32>} : memref<1x4x16x128xbf16, #tpu.memory_space<vmem>>, vector<1x1x16x128xbf16>,
    %49 = vector.extract_strided_slice %38 {offsets = [32, 0], sizes = [16, 128], strides = [1, 1]} : vector<64x128xf32> to vector<16x128xf32>
    %50 = arith.truncf %49 : vector<16x128xf32> to vector<16x128xbf16>
    %c0_25 = arith.constant 0 : index
    %c2 = arith.constant 2 : index
    %c0_26 = arith.constant 0 : index
    %c0_27 = arith.constant 0 : index
    %51 = vector.load %arg8[%c0_25, %c2, %c0_26, %c0_27] : memref<1x4x16x128xbf16, #tpu.memory_space<vmem>>, vector<1x1x16x128xbf16>
    %52 = vector.shape_cast %51 : vector<1x1x16x128xbf16> to vector<16x128xbf16>
    %53 = vector.shape_cast %50 : vector<16x128xbf16> to vector<1x1x16x128xbf16>
    tpu.vector_store %arg8[%c0_25, %c2, %c0_26, %c0_27], %53 {strides = array<i32>} : memref<1x4x16x128xbf16, #tpu.memory_space<vmem>>, vector<1x1x16x128xbf16>,
    %54 = vector.extract_strided_slice %38 {offsets = [48, 0], sizes = [16, 128], strides = [1, 1]} : vector<64x128xf32> to vector<16x128xf32>
    %55 = arith.truncf %54 : vector<16x128xf32> to vector<16x128xbf16>
    %c0_28 = arith.constant 0 : index
    %c3 = arith.constant 3 : index
    %c0_29 = arith.constant 0 : index
    %c0_30 = arith.constant 0 : index
    %56 = vector.load %arg8[%c0_28, %c3, %c0_29, %c0_30] : memref<1x4x16x128xbf16, #tpu.memory_space<vmem>>, vector<1x1x16x128xbf16>
    %57 = vector.shape_cast %56 : vector<1x1x16x128xbf16> to vector<16x128xbf16>
    %58 = vector.shape_cast %55 : vector<16x128xbf16> to vector<1x1x16x128xbf16>
    tpu.vector_store %arg8[%c0_28, %c3, %c0_29, %c0_30], %58 {strides = array<i32>} : memref<1x4x16x128xbf16, #tpu.memory_space<vmem>>, vector<1x1x16x128xbf16>,
    %59 = vector.extract_strided_slice %31 {offsets = [0, 128], sizes = [128, 64], strides = [1, 1]} : vector<128x192xf32> to vector<128x64xf32>
    %60 = arith.truncf %59 : vector<128x64xf32> to vector<128x64xbf16>
    %61 = vector.extract_strided_slice %60 {offsets = [0, 0], sizes = [128, 16], strides = [1, 1]} : vector<128x64xbf16> to vector<128x16xbf16>
    %c0_31 = arith.constant 0 : index
    %c0_32 = arith.constant 0 : index
    %c0_33 = arith.constant 0 : index
    %c0_34 = arith.constant 0 : index
    %62 = vector.load %arg9[%c0_31, %c0_32, %c0_33, %c0_34] : memref<1x4x128x16xbf16, #tpu.memory_space<vmem>>, vector<1x1x128x16xbf16>
    %63 = vector.shape_cast %62 : vector<1x1x128x16xbf16> to vector<128x16xbf16>
    %64 = vector.shape_cast %61 : vector<128x16xbf16> to vector<1x1x128x16xbf16>
    tpu.vector_store %arg9[%c0_31, %c0_32, %c0_33, %c0_34], %64 {strides = array<i32>} : memref<1x4x128x16xbf16, #tpu.memory_space<vmem>>, vector<1x1x128x16xbf16>,
    %65 = vector.extract_strided_slice %60 {offsets = [0, 16], sizes = [128, 16], strides = [1, 1]} : vector<128x64xbf16> to vector<128x16xbf16>
    %c0_35 = arith.constant 0 : index
    %c1_36 = arith.constant 1 : index
    %c0_37 = arith.constant 0 : index
    %c0_38 = arith.constant 0 : index
    %66 = vector.load %arg9[%c0_35, %c1_36, %c0_37, %c0_38] : memref<1x4x128x16xbf16, #tpu.memory_space<vmem>>, vector<1x1x128x16xbf16>
    %67 = vector.shape_cast %66 : vector<1x1x128x16xbf16> to vector<128x16xbf16>
    %68 = vector.shape_cast %65 : vector<128x16xbf16> to vector<1x1x128x16xbf16>
    tpu.vector_store %arg9[%c0_35, %c1_36, %c0_37, %c0_38], %68 {strides = array<i32>} : memref<1x4x128x16xbf16, #tpu.memory_space<vmem>>, vector<1x1x128x16xbf16>,
    %69 = vector.extract_strided_slice %60 {offsets = [0, 32], sizes = [128, 16], strides = [1, 1]} : vector<128x64xbf16> to vector<128x16xbf16>
    %c0_39 = arith.constant 0 : index
    %c2_40 = arith.constant 2 : index
    %c0_41 = arith.constant 0 : index
    %c0_42 = arith.constant 0 : index
    %70 = vector.load %arg9[%c0_39, %c2_40, %c0_41, %c0_42] : memref<1x4x128x16xbf16, #tpu.memory_space<vmem>>, vector<1x1x128x16xbf16>
    %71 = vector.shape_cast %70 : vector<1x1x128x16xbf16> to vector<128x16xbf16>
    %72 = vector.shape_cast %69 : vector<128x16xbf16> to vector<1x1x128x16xbf16>
    tpu.vector_store %arg9[%c0_39, %c2_40, %c0_41, %c0_42], %72 {strides = array<i32>} : memref<1x4x128x16xbf16, #tpu.memory_space<vmem>>, vector<1x1x128x16xbf16>,
    %73 = vector.extract_strided_slice %60 {offsets = [0, 48], sizes = [128, 16], strides = [1, 1]} : vector<128x64xbf16> to vector<128x16xbf16>
    %c0_43 = arith.constant 0 : index
    %c3_44 = arith.constant 3 : index
    %c0_45 = arith.constant 0 : index
    %c0_46 = arith.constant 0 : index
    %74 = vector.load %arg9[%c0_43, %c3_44, %c0_45, %c0_46] : memref<1x4x128x16xbf16, #tpu.memory_space<vmem>>, vector<1x1x128x16xbf16>
    %75 = vector.shape_cast %74 : vector<1x1x128x16xbf16> to vector<128x16xbf16>
    %76 = vector.shape_cast %73 : vector<128x16xbf16> to vector<1x1x128x16xbf16>
    tpu.vector_store %arg9[%c0_43, %c3_44, %c0_45, %c0_46], %76 {strides = array<i32>} : memref<1x4x128x16xbf16, #tpu.memory_space<vmem>>, vector<1x1x128x16xbf16>,
    return
  }
  func.func @transform_0(%arg0: i32, %arg1: i32) -> (i32, i32, i32) {
    %c0_i32 = arith.constant 0 : i32
    %c0_i32_0 = arith.constant 0 : i32
    return %arg0, %arg1, %c0_i32 : i32, i32, i32
  }
  func.func @transform_1(%arg0: i32, %arg1: i32) -> (i32, i32) {
    %c0_i32 = arith.constant 0 : i32
    %c0_i32_0 = arith.constant 0 : i32
    %c0_i32_1 = arith.constant 0 : i32
    return %c0_i32, %c0_i32_0 : i32, i32
  }
  func.func @transform_2(%arg0: i32, %arg1: i32) -> (i32, i32) {
    %c0_i32 = arith.constant 0 : i32
    %c0_i32_0 = arith.constant 0 : i32
    %c0_i32_1 = arith.constant 0 : i32
    return %c0_i32, %c0_i32_0 : i32, i32
  }
  func.func @transform_3(%arg0: i32, %arg1: i32) -> (i32, i32) {
    %c0_i32 = arith.constant 0 : i32
    %c0_i32_0 = arith.constant 0 : i32
    %c0_i32_1 = arith.constant 0 : i32
    return %c0_i32, %c0_i32_0 : i32, i32
  }
  func.func @transform_4(%arg0: i32, %arg1: i32) -> (i32, i32) {
    %c0_i32 = arith.constant 0 : i32
    %c0_i32_0 = arith.constant 0 : i32
    %c0_i32_1 = arith.constant 0 : i32
    return %c0_i32, %c0_i32_0 : i32, i32
  }
  func.func @transform_5(%arg0: i32, %arg1: i32) -> (i32, i32, i32) {
    %c0_i32 = arith.constant 0 : i32
    %c0_i32_0 = arith.constant 0 : i32
    return %arg0, %arg1, %c0_i32 : i32, i32, i32
  }
  func.func @transform_6(%arg0: i32, %arg1: i32) -> (i32, i32, i32, i32) {
    %c0_i32 = arith.constant 0 : i32
    %c0_i32_0 = arith.constant 0 : i32
    %c0_i32_1 = arith.constant 0 : i32
    return %arg0, %c0_i32, %c0_i32_0, %arg1 : i32, i32, i32, i32
  }
  func.func @transform_7(%arg0: i32, %arg1: i32) -> (i32, i32, i32, i32) {
    %c0_i32 = arith.constant 0 : i32
    %c0_i32_0 = arith.constant 0 : i32
    %c0_i32_1 = arith.constant 0 : i32
    return %arg0, %c0_i32, %arg1, %c0_i32_0 : i32, i32, i32, i32
  }
}

</mosaic_0001>

<llo_original>
// kernel: tpu_custom_call.1
$region0: #{tpu_custom_call.1}
  #allocation0 [shape = 'u32[]', space=smem, size = 0x4, offset = 0x4, fixed_abs, tag = 'smem constant byte address 0x4 - core index']
  #allocation1 [shape = 'u32[144,128]{1,0:T(1,128)}', space=vmem, size = 0x12000, scoped, tag = 'internal scratch']
  %s0 = inlined_call_operand.vmem [shape: f32[2,256,64], index: 0, kind: input, shape index: {}]
  %s1 = inlined_call_operand.vmem [shape: f32[1,64], index: 1, kind: input, shape index: {}]
  %s2 = inlined_call_operand.vmem [shape: f32[1,64], index: 2, kind: input, shape index: {}]
  %s3 = inlined_call_operand.vmem [shape: bf16[64,192], index: 3, kind: input, shape index: {}]
  %s4 = inlined_call_operand.vmem [shape: f32[1,192], index: 4, kind: input, shape index: {}]
  %s5 = inlined_call_operand.vmem [shape: bf16[2,256,64], index: 5, kind: output, shape index: {0}]
  %s6 = inlined_call_operand.hbm [shape: bf16[2,4,16,256], index: 6, kind: output, shape index: {1}]
  %s7 = inlined_call_operand.vmem [shape: bf16[2,4,256,16], index: 7, kind: output, shape index: {2}]
  %8 = xla_tuple %s5, %s6, %s7
  %s9 = sld [smem:[#allocation0]]
  $region106: #{tpu_custom_call.1} parent=0
    _
  %s11 = ssub.s32 1, %s9
  %s12 = scalar_select 0, %s11, %s9
  $region1: #{tpu_custom_call.1} parent=0
    #allocation2 [shape = 'u8[32768]{0}', space=vmem, size = 0x8000, scoped, tag = 'output window, operand 1']
    #allocation3 [shape = 's32[2]{0}', space=sflag, size = 0x8, scoped, tag = 'scoped memory for tpu_custom_call.1']
    #allocation4 [shape = 'u8[262144]{0}', space=vmem, size = 0x40000, scoped, tag = 'output window, operand 2']
    %13 = vsyncpa [#allocation3], 0
    %s14 = scalar_lea.sflag [#allocation3], 1
    %15 = vsyncpa %s14, 0
    loop: start=0, step=1, limit=6
    $region2: #{tpu_custom_call.1} parent=1 // loop_pre_header
      _
    $region3: #{tpu_custom_call.1} parent=1 // loop_header
      %s17 = sphi 0, %s21
      %p18 = scmp.ge.s32.totalorder %s17, 6
      %s24 = sphi 0, %s36
      %s25 = sphi 0, %s32
      %s26 = sphi 0, %s24
      %s27 = sphi 0, %s25
      %s28 = sphi 0, %s26
      %s29 = sphi 0, %s27
      %s41 = sphi 0, %s43
      %s44 = sphi 0, %s41
      %s45 = sphi 0, %s44
      %s61 = sphi 0, %s45
      %s65 = sphi 0, %s65
      %s67 = sphi 0, %s65
      %s68 = sphi 0, %s67
      %s82 = sphi 0, %s68
      %s86 = sphi 0, %s86
      %s88 = sphi 0, %s86
      %s89 = sphi 0, %s88
      %s103 = sphi 0, %s89
      %s107 = sphi 0, %s107
      %s109 = sphi 0, %s107
      %s110 = sphi 0, %s109
      %s124 = sphi 0, %s110
      %s128 = sphi 0, %s128
      %s130 = sphi 0, %s128
      %s131 = sphi 0, %s130
      %s145 = sphi 0, %s131
      %s153 = sphi 0, %s155
      %s156 = sphi 0, %s153
      %s157 = sphi 0, %s156
      %s173 = sphi 0, %s157
      %s181 = sphi 0, %s183
      %s184 = sphi 0, %s181
      %s185 = sphi 0, %s184
      %s201 = sphi 0, %s185
      %s209 = sphi 0, %s211
      %s212 = sphi 0, %s209
      %s213 = sphi 0, %s212
      %s229 = sphi 0, %s213
    $region4: #{tpu_custom_call.1} parent=1 // loop_header_branch
      %20 = sbr.rel (%p18) target = $region8
    $region5: #{tpu_custom_call.1} parent=1 // loop_body
      %s22 = ssub.s32 %s17, 1
      %s23 = ssub.s32 %s17, 2
      %s30 = sadd.s32 1, %s25
      %p31 = scmp.ge.s32.totalorder %s30, 2
      %s32 = scalar_select %p31, 0, %s30
      %s33 = sadd.s32 1, %s24
      %s34 = scalar_select %p31, %s33, %s24
      %p35 = scmp.ge.s32.totalorder %s34, 2
      %s36 = scalar_select %p35, 0, %s34
      %s37 = ssub.s32 %s24, %s36
      %s38 = ssub.s32 %s25, %s32
      %s39 = sor.u32 %s37, %s38
      %p40 = scmp.eq.s32.totalorder %s39, 0
      %s42 = sadd.s32 %s41, 1
      %s43 = scalar_select %p40, %s41, %s42
      %p46 = pneg %p40
      %p47 = scmp.eq.s32.totalorder %s17, 3
      %p48 = por %p46, %p47
      %p49 = scmp.ne.s32.totalorder %s41, %s44
      %p50 = scmp.eq.s32.totalorder %s17, 0
      %p51 = por %p49, %p50
      %p52 = scmp.ne.s32.totalorder %s41, %s44
      %p53 = scmp.eq.s32.totalorder %s22, 3
      %p54 = por %p52, %p53
      %p55 = scmp.ne.s32.totalorder %s44, %s45
      %p56 = scmp.eq.s32.totalorder %s22, 0
      %p57 = por %p55, %p56
      %p58 = scmp.ne.s32.totalorder %s44, %s45
      %p59 = scmp.eq.s32.totalorder %s23, 3
      %p60 = por %p58, %p59
      %p62 = scmp.ne.s32.totalorder %s45, %s61
      %p63 = scmp.eq.s32.totalorder %s23, 0
      %p64 = por %p62, %p63
      %s66 = sadd.s32 %s65, 1
      %p69 = scmp.eq.s32.totalorder %s17, 3
      %p70 = scmp.ne.s32.totalorder %s65, %s67
      %p71 = scmp.eq.s32.totalorder %s17, 0
      %p72 = por %p70, %p71
      %p73 = scmp.ne.s32.totalorder %s65, %s67
      %p74 = scmp.eq.s32.totalorder %s22, 3
      %p75 = por %p73, %p74
      %p76 = scmp.ne.s32.totalorder %s67, %s68
      %p77 = scmp.eq.s32.totalorder %s22, 0
      %p78 = por %p76, %p77
      %p79 = scmp.ne.s32.totalorder %s67, %s68
      %p80 = scmp.eq.s32.totalorder %s23, 3
      %p81 = por %p79, %p80
      %p83 = scmp.ne.s32.totalorder %s68, %s82
      %p84 = scmp.eq.s32.totalorder %s23, 0
      %p85 = por %p83, %p84
      %s87 = sadd.s32 %s86, 1
      %p90 = scmp.eq.s32.totalorder %s17, 3
      %p91 = scmp.ne.s32.totalorder %s86, %s88
      %p92 = scmp.eq.s32.totalorder %s17, 0
      %p93 = por %p91, %p92
      %p94 = scmp.ne.s32.totalorder %s86, %s88
      %p95 = scmp.eq.s32.totalorder %s22, 3
      %p96 = por %p94, %p95
      %p97 = scmp.ne.s32.totalorder %s88, %s89
      %p98 = scmp.eq.s32.totalorder %s22, 0
      %p99 = por %p97, %p98
      %p100 = scmp.ne.s32.totalorder %s88, %s89
      %p101 = scmp.eq.s32.totalorder %s23, 3
      %p102 = por %p100, %p101
      %p104 = scmp.ne.s32.totalorder %s89, %s103
      %p105 = scmp.eq.s32.totalorder %s23, 0
      %p106 = por %p104, %p105
      %s108 = sadd.s32 %s107, 1
      %p111 = scmp.eq.s32.totalorder %s17, 3
      %p112 = scmp.ne.s32.totalorder %s107, %s109
      %p113 = scmp.eq.s32.totalorder %s17, 0
      %p114 = por %p112, %p113
      %p115 = scmp.ne.s32.totalorder %s107, %s109
      %p116 = scmp.eq.s32.totalorder %s22, 3
      %p117 = por %p115, %p116
      %p118 = scmp.ne.s32.totalorder %s109, %s110
      %p119 = scmp.eq.s32.totalorder %s22, 0
      %p120 = por %p118, %p119
      %p121 = scmp.ne.s32.totalorder %s109, %s110
      %p122 = scmp.eq.s32.totalorder %s23, 3
      %p123 = por %p121, %p122
      %p125 = scmp.ne.s32.totalorder %s110, %s124
      %p126 = scmp.eq.s32.totalorder %s23, 0
      %p127 = por %p125, %p126
      %s129 = sadd.s32 %s128, 1
      %p132 = scmp.eq.s32.totalorder %s17, 3
      %p133 = scmp.ne.s32.totalorder %s128, %s130
      %p134 = scmp.eq.s32.totalorder %s17, 0
      %p135 = por %p133, %p134
      %p136 = scmp.ne.s32.totalorder %s128, %s130
      %p137 = scmp.eq.s32.totalorder %s22, 3
      %p138 = por %p136, %p137
      %p139 = scmp.ne.s32.totalorder %s130, %s131
      %p140 = scmp.eq.s32.totalorder %s22, 0
      %p141 = por %p139, %p140
      %p142 = scmp.ne.s32.totalorder %s130, %s131
      %p143 = scmp.eq.s32.totalorder %s23, 3
      %p144 = por %p142, %p143
      %p146 = scmp.ne.s32.totalorder %s131, %s145
      %p147 = scmp.eq.s32.totalorder %s23, 0
      %p148 = por %p146, %p147
      %s149 = ssub.s32 %s24, %s36
      %s150 = ssub.s32 %s25, %s32
      %s151 = sor.u32 %s149, %s150
      %p152 = scmp.eq.s32.totalorder %s151, 0
      %s154 = sadd.s32 %s153, 1
      %s155 = scalar_select %p152, %s153, %s154
      %p158 = pneg %p152
      %p159 = scmp.eq.s32.totalorder %s17, 3
      %p160 = por %p158, %p159
      %p161 = scmp.ne.s32.totalorder %s153, %s156
      %p162 = scmp.eq.s32.totalorder %s17, 0
      %p163 = por %p161, %p162
      %p164 = scmp.ne.s32.totalorder %s153, %s156
      %p165 = scmp.eq.s32.totalorder %s22, 3
      %p166 = por %p164, %p165
      %p167 = scmp.ne.s32.totalorder %s156, %s157
      %p168 = scmp.eq.s32.totalorder %s22, 0
      %p169 = por %p167, %p168
      %p170 = scmp.ne.s32.totalorder %s156, %s157
      %p171 = scmp.eq.s32.totalorder %s23, 3
      %p172 = por %p170, %p171
      %p174 = scmp.ne.s32.totalorder %s157, %s173
      %p175 = scmp.eq.s32.totalorder %s23, 0
      %p176 = por %p174, %p175
      %s177 = ssub.s32 %s24, %s36
      %s178 = ssub.s32 %s25, %s32
      %s179 = sor.u32 %s177, %s178
      %p180 = scmp.eq.s32.totalorder %s179, 0
      %s182 = sadd.s32 %s181, 1
      %s183 = scalar_select %p180, %s181, %s182
      %p186 = pneg %p180
      %p187 = scmp.eq.s32.totalorder %s17, 3
      %p188 = por %p186, %p187
      %p189 = scmp.ne.s32.totalorder %s181, %s184
      %p190 = scmp.eq.s32.totalorder %s17, 0
      %p191 = por %p189, %p190
      %p192 = scmp.ne.s32.totalorder %s181, %s184
      %p193 = scmp.eq.s32.totalorder %s22, 3
      %p194 = por %p192, %p193
      %p195 = scmp.ne.s32.totalorder %s184, %s185
      %p196 = scmp.eq.s32.totalorder %s22, 0
      %p197 = por %p195, %p196
      %p198 = scmp.ne.s32.totalorder %s184, %s185
      %p199 = scmp.eq.s32.totalorder %s23, 3
      %p200 = por %p198, %p199
      %p202 = scmp.ne.s32.totalorder %s185, %s201
      %p203 = scmp.eq.s32.totalorder %s23, 0
      %p204 = por %p202, %p203
      %s205 = ssub.s32 %s24, %s36
      %s206 = ssub.s32 %s25, %s32
      %s207 = sor.u32 %s205, %s206
      %p208 = scmp.eq.s32.totalorder %s207, 0
      %s210 = sadd.s32 %s209, 1
      %s211 = scalar_select %p208, %s209, %s210
      %p214 = pneg %p208
      %p215 = scmp.eq.s32.totalorder %s17, 3
      %p216 = por %p214, %p215
      %p217 = scmp.ne.s32.totalorder %s209, %s212
      %p218 = scmp.eq.s32.totalorder %s17, 0
      %p219 = por %p217, %p218
      %p220 = scmp.ne.s32.totalorder %s209, %s212
      %p221 = scmp.eq.s32.totalorder %s22, 3
      %p222 = por %p220, %p221
      %p223 = scmp.ne.s32.totalorder %s212, %s213
      %p224 = scmp.eq.s32.totalorder %s22, 0
      %p225 = por %p223, %p224
      %p226 = scmp.ne.s32.totalorder %s212, %s213
      %p227 = scmp.eq.s32.totalorder %s23, 3
      %p228 = por %p226, %p227
      %p230 = scmp.ne.s32.totalorder %s213, %s229
      %p231 = scmp.eq.s32.totalorder %s23, 0
      %p232 = por %p230, %p231
      %p233 = scmp.le.s32.totalorder 1, %s17
      %p234 = scmp.lt.s32.totalorder %s17, 5
      %p235 = pnand %p233, %p234
      %p236 = pneg %p235
      // Predicated region
      $region9: #{tpu_custom_call.1} parent=5 // pred_check
        _
      $region10: #{tpu_custom_call.1} parent=5 // pred_check_branch
        %238 = sbr.rel (%p235) target = $region12
      $region11: #{tpu_custom_call.1} parent=5 // pred_region
        %s239 = ssub.s32 %s17, 1
        // Predicated region
        $region13: #{tpu_custom_call.1} parent=11 // pred_check
          %p240 = pneg %p78
        $region14: #{tpu_custom_call.1} parent=11 // pred_check_branch
          %242 = sbr.rel (%p240) target = $region16
        $region15: #{tpu_custom_call.1} parent=11 // pred_region
          _
        $region16: #{tpu_custom_call.1} parent=11 // pred_fallthru
          _
        // Predicated region
        $region17: #{tpu_custom_call.1} parent=11 // pred_check
          %p243 = pneg %p99
        $region18: #{tpu_custom_call.1} parent=11 // pred_check_branch
          %245 = sbr.rel (%p243) target = $region20
        $region19: #{tpu_custom_call.1} parent=11 // pred_region
          _
        $region20: #{tpu_custom_call.1} parent=11 // pred_fallthru
          _
        // Predicated region
        $region21: #{tpu_custom_call.1} parent=11 // pred_check
          %p246 = pneg %p120
        $region22: #{tpu_custom_call.1} parent=11 // pred_check_branch
          %248 = sbr.rel (%p246) target = $region24
        $region23: #{tpu_custom_call.1} parent=11 // pred_region
          _
        $region24: #{tpu_custom_call.1} parent=11 // pred_fallthru
          _
        // Predicated region
        $region25: #{tpu_custom_call.1} parent=11 // pred_check
          %p249 = pneg %p141
        $region26: #{tpu_custom_call.1} parent=11 // pred_check_branch
          %251 = sbr.rel (%p249) target = $region28
        $region27: #{tpu_custom_call.1} parent=11 // pred_region
          _
        $region28: #{tpu_custom_call.1} parent=11 // pred_fallthru
          _
      $region12: #{tpu_custom_call.1} parent=5 // pred_fallthru
        _
      %p252 = scmp.lt.s32.totalorder %s17, 4
      // Predicated region
      $region29: #{tpu_custom_call.1} parent=5 // pred_check
        %p253 = pneg %p252
      $region30: #{tpu_custom_call.1} parent=5 // pred_check_branch
        %255 = sbr.rel (%p253) target = $region32
      $region31: #{tpu_custom_call.1} parent=5 // pred_region
        // Predicated region
        $region33: #{tpu_custom_call.1} parent=31 // pred_check
          %p256 = pneg %p51
        $region34: #{tpu_custom_call.1} parent=31 // pred_check_branch
          %258 = sbr.rel (%p256) target = $region36
        $region35: #{tpu_custom_call.1} parent=31 // pred_region
          %s259 = smul.u32 16, %s25
          %p260 = scmp.lt.s32.totalorder %s24, 1
          %s261 = scalar_select %p260, %s24, 1
          %p262 = scmp.lt.s32.totalorder %s259, 31
          %s263 = scalar_select %p262, %s259, 31
          %s264 = smul.addr %s261, 32
          %s265 = sadd.s32 %s263, %s264
          %s266 = smul.addr %s265, 8
          %s267 = scalar_lea.vmem %s0, %s266
          %s268 = smul.u32 16, %s25
        $region36: #{tpu_custom_call.1} parent=31 // pred_fallthru
          _
      $region32: #{tpu_custom_call.1} parent=5 // pred_fallthru
        _
      %p269 = scmp.le.s32.totalorder 1, %s17
      %p270 = scmp.lt.s32.totalorder %s17, 5
      %p271 = pnand %p269, %p270
      %p272 = pneg %p271
      // Predicated region
      $region37: #{tpu_custom_call.1} parent=5 // pred_check
        _
      $region38: #{tpu_custom_call.1} parent=5 // pred_check_branch
        %274 = sbr.rel (%p271) target = $region40
      $region39: #{tpu_custom_call.1} parent=5 // pred_region
        %s275 = ssub.s32 %s17, 1
        %s276 = smul.u32 16, %s27
        %p277 = scmp.lt.s32.totalorder %s26, 1
        %s278 = scalar_select %p277, %s26, 1
        %p279 = scmp.lt.s32.totalorder %s276, 31
        %s280 = scalar_select %p279, %s276, 31
        %s281 = smul.addr %s278, 32
        %s282 = sadd.s32 %s280, %s281
        %s283 = smul.addr %s282, 8
        %s284 = scalar_lea.vmem %s0, %s283
        %p285 = pneg %p57
        %p286 = pneg %p54
        %p287 = pneg %p78
        %p288 = pneg %p75
        %p289 = pneg %p99
        %p290 = pneg %p96
        %p291 = pneg %p120
        %p292 = pneg %p117
        %p293 = pneg %p141
        %p294 = pneg %p138
        %p295 = pneg %p169
        %p296 = pneg %p166
        %s297 = smul.u32 16, %s27
        %p298 = scmp.lt.s32.totalorder %s26, 1
        %s299 = scalar_select %p298, %s26, 1
        %p300 = scmp.lt.s32.totalorder %s297, 31
        %s301 = scalar_select %p300, %s297, 31
        %s302 = smul.addr %s299, 32
        %s303 = sadd.s32 %s301, %s302
        %s304 = smul.addr %s303, 4
        %s305 = scalar_lea.vmem %s5, %s304
        %p306 = pneg %p197
        %p307 = pneg %p194
        %s308 = sand.u32 %s184, 1
        %s309 = scalar_lea.sflag [#allocation3], %s308
        %s310 = sand.u32 %s184, 1
        %s311 = smul.addr %s310, 32
        %s312 = scalar_lea.vmem [#allocation2], %s311
        %p313 = pneg %p225
        %p314 = pneg %p222
        %s315 = sand.u32 %s212, 1
        %s316 = sand.u32 %s212, 1
        %s317 = smul.addr %s316, 256
        %s318 = scalar_lea.vmem [#allocation4], %s317
        %s319 = smul.u32 16, %s27
        %p320 = scmp.lt.s32.totalorder %s26, 1
        %s321 = scalar_select %p320, %s26, 1
        %p322 = scmp.lt.s32.totalorder %s319, 31
        %s323 = scalar_select %p322, %s319, 31
        %s324 = smul.addr %s321, 32
        %s325 = sadd.s32 %s323, %s324
        %s326 = smul.addr %s325, 8
        %s327 = scalar_lea.vmem %s0, %s326
        %s328 = smul.u32 16, %s27
        %s329 = smul.u32 16, %s27
        %p330 = scmp.lt.s32.totalorder %s26, 1
        %s331 = scalar_select %p330, %s26, 1
        %p332 = scmp.lt.s32.totalorder %s329, 31
        %s333 = scalar_select %p332, %s329, 31
        %s334 = smul.addr %s331, 32
        %s335 = sadd.s32 %s333, %s334
        %s336 = smul.addr %s335, 4
        %s337 = scalar_lea.vmem %s5, %s336
        %s338 = smul.u32 16, %s27
        %s339 = smul.u32 16, %s27
        %v341 = vld [vmem:[%s327] sm:$0xff]
        %v342 = vld [vmem:[%s327 + $0x8] sm:$0xff]
        %v343 = vld [vmem:[%s327 + $0x10] sm:$0xff]
        %v344 = vld [vmem:[%s327 + $0x18] sm:$0xff]
        %v345 = vld [vmem:[%s327 + $0x20] sm:$0xff]
        %v346 = vld [vmem:[%s327 + $0x28] sm:$0xff]
        %v347 = vld [vmem:[%s327 + $0x30] sm:$0xff]
        %v348 = vld [vmem:[%s327 + $0x38] sm:$0xff]
        %v349 = vld [vmem:[%s327 + $0x40] sm:$0xff]
        %v350 = vld [vmem:[%s327 + $0x48] sm:$0xff]
        %v351 = vld [vmem:[%s327 + $0x50] sm:$0xff]
        %v352 = vld [vmem:[%s327 + $0x58] sm:$0xff]
        %v353 = vld [vmem:[%s327 + $0x60] sm:$0xff]
        %v354 = vld [vmem:[%s327 + $0x68] sm:$0xff]
        %v355 = vld [vmem:[%s327 + $0x70] sm:$0xff]
        %v356 = vld [vmem:[%s327 + $0x78] sm:$0xff]
        %v357 = vld [vmem:[%s1] sm:$0x1]
        %v358 = vld [vmem:[%s2] sm:$0x1]
        %vm359 = vcmask 523264
        %v360 = vsel %vm359, %v341, 0.0
        %361 = vadd.xlane.f32.xlu0 %v360
        %v362 = vpop.xlane.xlu0 %361
        %v363 = vsel %vm359, %v342, 0.0
        %364 = vadd.xlane.f32.xlu0 %v363
        %v365 = vpop.xlane.xlu0 %364
        %v366 = vsel %vm359, %v343, 0.0
        %367 = vadd.xlane.f32.xlu0 %v366
        %v368 = vpop.xlane.xlu0 %367
        %v369 = vsel %vm359, %v344, 0.0
        %370 = vadd.xlane.f32.xlu0 %v369
        %v371 = vpop.xlane.xlu0 %370
        %v372 = vsel %vm359, %v345, 0.0
        %373 = vadd.xlane.f32.xlu0 %v372
        %v374 = vpop.xlane.xlu0 %373
        %v375 = vsel %vm359, %v346, 0.0
        %376 = vadd.xlane.f32.xlu0 %v375
        %v377 = vpop.xlane.xlu0 %376
        %v378 = vsel %vm359, %v347, 0.0
        %379 = vadd.xlane.f32.xlu0 %v378
        %v380 = vpop.xlane.xlu0 %379
        %v381 = vsel %vm359, %v348, 0.0
        %382 = vadd.xlane.f32.xlu0 %v381
        %v383 = vpop.xlane.xlu0 %382
        %v384 = vsel %vm359, %v349, 0.0
        %385 = vadd.xlane.f32.xlu0 %v384
        %v386 = vpop.xlane.xlu0 %385
        %v387 = vsel %vm359, %v350, 0.0
        %388 = vadd.xlane.f32.xlu0 %v387
        %v389 = vpop.xlane.xlu0 %388
        %v390 = vsel %vm359, %v351, 0.0
        %391 = vadd.xlane.f32.xlu0 %v390
        %v392 = vpop.xlane.xlu0 %391
        %v393 = vsel %vm359, %v352, 0.0
        %394 = vadd.xlane.f32.xlu0 %v393
        %v395 = vpop.xlane.xlu0 %394
        %v396 = vsel %vm359, %v353, 0.0
        %397 = vadd.xlane.f32.xlu0 %v396
        %v398 = vpop.xlane.xlu0 %397
        %v399 = vsel %vm359, %v354, 0.0
        %400 = vadd.xlane.f32.xlu0 %v399
        %v401 = vpop.xlane.xlu0 %400
        %v402 = vsel %vm359, %v355, 0.0
        %403 = vadd.xlane.f32.xlu0 %v402
        %v404 = vpop.xlane.xlu0 %403
        %v405 = vsel %vm359, %v356, 0.0
        %406 = vadd.xlane.f32.xlu0 %v405
        %v407 = vpop.xlane.xlu0 %406
        %v408 = vrcp.pop 64.0
        %v409 = vmul.f32 %v362, %v408
        %v410 = vmul.f32 %v365, %v408
        %v411 = vmul.f32 %v368, %v408
        %v412 = vmul.f32 %v371, %v408
        %v413 = vmul.f32 %v374, %v408
        %v414 = vmul.f32 %v377, %v408
        %v415 = vmul.f32 %v380, %v408
        %v416 = vmul.f32 %v383, %v408
        %v417 = vmul.f32 %v386, %v408
        %v418 = vmul.f32 %v389, %v408
        %v419 = vmul.f32 %v392, %v408
        %v420 = vmul.f32 %v395, %v408
        %v421 = vmul.f32 %v398, %v408
        %v422 = vmul.f32 %v401, %v408
        %v423 = vmul.f32 %v404, %v408
        %v424 = vmul.f32 %v407, %v408
        %v425 = vsub.f32 %v341, %v409
        %v426 = vsub.f32 %v342, %v410
        %v427 = vsub.f32 %v343, %v411
        %v428 = vsub.f32 %v344, %v412
        %v429 = vsub.f32 %v345, %v413
        %v430 = vsub.f32 %v346, %v414
        %v431 = vsub.f32 %v347, %v415
        %v432 = vsub.f32 %v348, %v416
        %v433 = vsub.f32 %v349, %v417
        %v434 = vsub.f32 %v350, %v418
        %v435 = vsub.f32 %v351, %v419
        %v436 = vsub.f32 %v352, %v420
        %v437 = vsub.f32 %v353, %v421
        %v438 = vsub.f32 %v354, %v422
        %v439 = vsub.f32 %v355, %v423
        %v440 = vsub.f32 %v356, %v424
        %v441 = vmul.f32 %v425, %v425
        %v442 = vmul.f32 %v426, %v426
        %v443 = vmul.f32 %v427, %v427
        %v444 = vmul.f32 %v428, %v428
        %v445 = vmul.f32 %v429, %v429
        %v446 = vmul.f32 %v430, %v430
        %v447 = vmul.f32 %v431, %v431
        %v448 = vmul.f32 %v432, %v432
        %v449 = vmul.f32 %v433, %v433
        %v450 = vmul.f32 %v434, %v434
        %v451 = vmul.f32 %v435, %v435
        %v452 = vmul.f32 %v436, %v436
        %v453 = vmul.f32 %v437, %v437
        %v454 = vmul.f32 %v438, %v438
        %v455 = vmul.f32 %v439, %v439
        %v456 = vmul.f32 %v440, %v440
        %v457 = vsel %vm359, %v441, 0.0
        %458 = vadd.xlane.f32.xlu0 %v457
        %v459 = vpop.xlane.xlu0 %458
        %v460 = vsel %vm359, %v442, 0.0
        %461 = vadd.xlane.f32.xlu0 %v460
        %v462 = vpop.xlane.xlu0 %461
        %v463 = vsel %vm359, %v443, 0.0
        %464 = vadd.xlane.f32.xlu0 %v463
        %v465 = vpop.xlane.xlu0 %464
        %v466 = vsel %vm359, %v444, 0.0
        %467 = vadd.xlane.f32.xlu0 %v466
        %v468 = vpop.xlane.xlu0 %467
        %v469 = vsel %vm359, %v445, 0.0
        %470 = vadd.xlane.f32.xlu0 %v469
        %v471 = vpop.xlane.xlu0 %470
        %v472 = vsel %vm359, %v446, 0.0
        %473 = vadd.xlane.f32.xlu0 %v472
        %v474 = vpop.xlane.xlu0 %473
        %v475 = vsel %vm359, %v447, 0.0
        %476 = vadd.xlane.f32.xlu0 %v475
        %v477 = vpop.xlane.xlu0 %476
        %v478 = vsel %vm359, %v448, 0.0
        %479 = vadd.xlane.f32.xlu0 %v478
        %v480 = vpop.xlane.xlu0 %479
        %v481 = vsel %vm359, %v449, 0.0
        %482 = vadd.xlane.f32.xlu0 %v481
        %v483 = vpop.xlane.xlu0 %482
        %v484 = vsel %vm359, %v450, 0.0
        %485 = vadd.xlane.f32.xlu0 %v484
        %v486 = vpop.xlane.xlu0 %485
        %v487 = vsel %vm359, %v451, 0.0
        %488 = vadd.xlane.f32.xlu0 %v487
        %v489 = vpop.xlane.xlu0 %488
        %v490 = vsel %vm359, %v452, 0.0
        %491 = vadd.xlane.f32.xlu0 %v490
        %v492 = vpop.xlane.xlu0 %491
        %v493 = vsel %vm359, %v453, 0.0
        %494 = vadd.xlane.f32.xlu0 %v493
        %v495 = vpop.xlane.xlu0 %494
        %v496 = vsel %vm359, %v454, 0.0
        %497 = vadd.xlane.f32.xlu0 %v496
        %v498 = vpop.xlane.xlu0 %497
        %v499 = vsel %vm359, %v455, 0.0
        %500 = vadd.xlane.f32.xlu0 %v499
        %v501 = vpop.xlane.xlu0 %500
        %v502 = vsel %vm359, %v456, 0.0
        %503 = vadd.xlane.f32.xlu0 %v502
        %v504 = vpop.xlane.xlu0 %503
        %v505 = vmul.f32 %v459, %v408
        %v506 = vmul.f32 %v462, %v408
        %v507 = vmul.f32 %v465, %v408
        %v508 = vmul.f32 %v468, %v408
        %v509 = vmul.f32 %v471, %v408
        %v510 = vmul.f32 %v474, %v408
        %v511 = vmul.f32 %v477, %v408
        %v512 = vmul.f32 %v480, %v408
        %v513 = vmul.f32 %v483, %v408
        %v514 = vmul.f32 %v486, %v408
        %v515 = vmul.f32 %v489, %v408
        %v516 = vmul.f32 %v492, %v408
        %v517 = vmul.f32 %v495, %v408
        %v518 = vmul.f32 %v498, %v408
        %v519 = vmul.f32 %v501, %v408
        %v520 = vmul.f32 %v504, %v408
        %v521 = vadd.f32 %v505, 1e-05
        %v522 = vadd.f32 %v506, 1e-05
        %v523 = vadd.f32 %v507, 1e-05
        %v524 = vadd.f32 %v508, 1e-05
        %v525 = vadd.f32 %v509, 1e-05
        %v526 = vadd.f32 %v510, 1e-05
        %v527 = vadd.f32 %v511, 1e-05
        %v528 = vadd.f32 %v512, 1e-05
        %v529 = vadd.f32 %v513, 1e-05
        %v530 = vadd.f32 %v514, 1e-05
        %v531 = vadd.f32 %v515, 1e-05
        %v532 = vadd.f32 %v516, 1e-05
        %v533 = vadd.f32 %v517, 1e-05
        %v534 = vadd.f32 %v518, 1e-05
        %v535 = vadd.f32 %v519, 1e-05
        %v536 = vadd.f32 %v520, 1e-05
        %v537 = vrsqrt.pop %v521
        %v538 = vrsqrt.pop %v522
        %v539 = vrsqrt.pop %v523
        %v540 = vrsqrt.pop %v524
        %v541 = vrsqrt.pop %v525
        %v542 = vrsqrt.pop %v526
        %v543 = vrsqrt.pop %v527
        %v544 = vrsqrt.pop %v528
        %v545 = vrsqrt.pop %v529
        %v546 = vrsqrt.pop %v530
        %v547 = vrsqrt.pop %v531
        %v548 = vrsqrt.pop %v532
        %v549 = vrsqrt.pop %v533
        %v550 = vrsqrt.pop %v534
        %v551 = vrsqrt.pop %v535
        %v552 = vrsqrt.pop %v536
        %v553 = vmul.f32 %v425, %v537
        %v554 = vmul.f32 %v426, %v538
        %v555 = vmul.f32 %v427, %v539
        %v556 = vmul.f32 %v428, %v540
        %v557 = vmul.f32 %v429, %v541
        %v558 = vmul.f32 %v430, %v542
        %v559 = vmul.f32 %v431, %v543
        %v560 = vmul.f32 %v432, %v544
        %v561 = vmul.f32 %v433, %v545
        %v562 = vmul.f32 %v434, %v546
        %v563 = vmul.f32 %v435, %v547
        %v564 = vmul.f32 %v436, %v548
        %v565 = vmul.f32 %v437, %v549
        %v566 = vmul.f32 %v438, %v550
        %v567 = vmul.f32 %v439, %v551
        %v568 = vmul.f32 %v440, %v552
        %v570 = vlaneseq
        %v571 = vshrl.u32 %v570, 7
        %v572 = vsub.s32 0, %v571
        %v573 = vrot.slane %v357, %v572
        %v575 = vmul.f32 %v553, %v573
        %v576 = vmul.f32 %v554, %v573
        %v577 = vmul.f32 %v555, %v573
        %v578 = vmul.f32 %v556, %v573
        %v579 = vmul.f32 %v557, %v573
        %v580 = vmul.f32 %v558, %v573
        %v581 = vmul.f32 %v559, %v573
        %v582 = vmul.f32 %v560, %v573
        %v583 = vmul.f32 %v561, %v573
        %v584 = vmul.f32 %v562, %v573
        %v585 = vmul.f32 %v563, %v573
        %v586 = vmul.f32 %v564, %v573
        %v587 = vmul.f32 %v565, %v573
        %v588 = vmul.f32 %v566, %v573
        %v589 = vmul.f32 %v567, %v573
        %v590 = vmul.f32 %v568, %v573
        %v592 = vlaneseq
        %v593 = vshrl.u32 %v592, 7
        %v594 = vsub.s32 0, %v593
        %v595 = vrot.slane %v358, %v594
        %v597 = vadd.f32 %v575, %v595
        %v598 = vadd.f32 %v576, %v595
        %v599 = vadd.f32 %v577, %v595
        %v600 = vadd.f32 %v578, %v595
        %v601 = vadd.f32 %v579, %v595
        %v602 = vadd.f32 %v580, %v595
        %v603 = vadd.f32 %v581, %v595
        %v604 = vadd.f32 %v582, %v595
        %v605 = vadd.f32 %v583, %v595
        %v606 = vadd.f32 %v584, %v595
        %v607 = vadd.f32 %v585, %v595
        %v608 = vadd.f32 %v586, %v595
        %v609 = vadd.f32 %v587, %v595
        %v610 = vadd.f32 %v588, %v595
        %v611 = vadd.f32 %v589, %v595
        %v612 = vadd.f32 %v590, %v595
        %v613 = vpack.c.bf16 %v598, %v597
        %v614 = vpack.c.bf16 %v600, %v599
        %v615 = vpack.c.bf16 %v602, %v601
        %v616 = vpack.c.bf16 %v604, %v603
        %v617 = vpack.c.bf16 %v606, %v605
        %v618 = vpack.c.bf16 %v608, %v607
        %v619 = vpack.c.bf16 %v610, %v609
        %v620 = vpack.c.bf16 %v612, %v611
        %v621 = vld [vmem:[%s3] sm:$0xff]
        %v622 = vld [vmem:[%s3 + $0x8] sm:$0xff]
        %v623 = vld [vmem:[%s3 + $0x10] sm:$0xff]
        %v624 = vld [vmem:[%s3 + $0x18] sm:$0xff]
        %v625 = vld [vmem:[%s3 + $0x20] sm:$0xff]
        %v626 = vld [vmem:[%s3 + $0x28] sm:$0xff]
        %v627 = vld [vmem:[%s3 + $0x30] sm:$0xff]
        %v628 = vld [vmem:[%s3 + $0x38] sm:$0xff]
        %v629 = vld [vmem:[%s4] sm:$0x3]
        %v631 = vlaneseq
        %v632 = vshrl.u32 %v631, 7
        %v633 = vsub.s32 0, %v632
        %v634 = vrot.slane %v629, %v633
        %v635 = vlaneseq
        %v636 = vshrl.u32 %v635, 7
        %v637 = vsub.s32 1, %v636
        %v638 = vrot.slane %v629, %v637
        %v649 = vunpack.c.l.b16 %v621
        %v650 = vunpack.c.h.b16 %v621
        %v651 = vunpack.c.l.b16 %v622
        %v652 = vunpack.c.h.b16 %v622
        %v653 = vunpack.c.l.b16 %v623
        %v654 = vunpack.c.h.b16 %v623
        %v655 = vunpack.c.l.b16 %v624
        %v656 = vunpack.c.h.b16 %v624
        %v657 = vunpack.c.l.b16 %v625
        %v658 = vunpack.c.h.b16 %v625
        %v659 = vunpack.c.l.b16 %v626
        %v660 = vunpack.c.h.b16 %v626
        %v661 = vunpack.c.l.b16 %v627
        %v662 = vunpack.c.h.b16 %v627
        %v663 = vunpack.c.l.b16 %v628
        %v664 = vunpack.c.h.b16 %v628
        %v665 = vpack.c.b16 %v651, %v649
        %v666 = vpack.c.b16 %v652, %v650
        %v667 = vpack.c.b16 %v655, %v653
        %v668 = vpack.c.b16 %v656, %v654
        %v669 = vpack.c.b16 %v659, %v657
        %v670 = vpack.c.b16 %v660, %v658
        %v671 = vpack.c.b16 %v663, %v661
        %v672 = vpack.c.b16 %v664, %v662
        %v682 = vsel %vm359, %v613, 0
        %v685 = vsel %vm359, %v614, 0
        %v688 = vsel %vm359, %v615, 0
        %v691 = vsel %vm359, %v616, 0
        %v694 = vsel %vm359, %v617, 0
        %v697 = vsel %vm359, %v618, 0
        %v700 = vsel %vm359, %v619, 0
        %v703 = vsel %vm359, %v620, 0
        %705 = vmatprep.subr.bf16.mxu0 0
        %706 = vmatpush1.bf16.msra.mxu0 0
        %707 = vmatprep.subr.bf16.mxu0 0
        %708 = vmatpush1.bf16.msra.mxu0 0
        %709 = vmatprep.subr.bf16.mxu0 0
        %710 = vmatpush1.bf16.msra.mxu0 0
        %711 = vmatprep.subr.bf16.mxu0 0
        %712 = vmatpush1.bf16.msra.mxu0 0
        %713 = vmatprep.subr.bf16.mxu0 %v672
        %714 = vmatpush1.bf16.msra.mxu0 %v671
        %715 = vmatprep.subr.bf16.mxu0 %v670
        %716 = vmatpush1.bf16.msra.mxu0 %v669
        %717 = vmatprep.subr.bf16.mxu0 %v668
        %718 = vmatpush1.bf16.msra.mxu0 %v667
        %719 = vmatprep.subr.bf16.mxu0 %v666
        %720 = vmatpush1.bf16.msra.mxu0 %v665
        %721 = vmatprep.subr.bf16.mxu0 0
        %722 = vmatpush2.bf16.msra.mxu0 0
        %723 = vmatprep.subr.bf16.mxu0 0
        %724 = vmatpush2.bf16.msra.mxu0 0
        %725 = vmatprep.subr.bf16.mxu0 0
        %726 = vmatpush2.bf16.msra.mxu0 0
        %727 = vmatprep.subr.bf16.mxu0 0
        %728 = vmatpush2.bf16.msra.mxu0 0
        %729 = vmatprep.subr.bf16.mxu0 0
        %730 = vmatpush2.bf16.msra.mxu0 0
        %731 = vmatprep.subr.bf16.mxu0 0
        %732 = vmatpush2.bf16.msra.mxu0 0
        %733 = vmatprep.subr.bf16.mxu0 0
        %734 = vmatpush2.bf16.msra.mxu0 0
        %735 = vmatprep.subr.bf16.mxu0 0
        %736 = vmatpush2.bf16.msra.mxu0 0
        %737 = vmatprep.mubr.bf16.mxu0 0
        %738 = vmatmul.mubr.bf16.gmra.mxu0 %v682
        %v739 = vpop.f32.mrf.mxu0
        %v740 = vadd.f32 %v634, %v739
        %v741 = vpop.f32.mrf.mxu0
        %v742 = vadd.f32 %v638, %v741
        %v743 = vpop.f32.mrf.mxu0
        %v744 = vadd.f32 %v634, %v743
        %v745 = vpop.f32.mrf.mxu0
        %v746 = vadd.f32 %v638, %v745
        %747 = vmatprep.mubr.bf16.mxu0 0
        %748 = vmatmul.mubr.bf16.gmra.mxu0 %v685
        %v749 = vpop.f32.mrf.mxu0
        %v750 = vadd.f32 %v634, %v749
        %v751 = vpop.f32.mrf.mxu0
        %v752 = vadd.f32 %v638, %v751
        %v753 = vpop.f32.mrf.mxu0
        %v754 = vadd.f32 %v634, %v753
        %v755 = vpop.f32.mrf.mxu0
        %v756 = vadd.f32 %v638, %v755
        %757 = vmatprep.mubr.bf16.mxu0 0
        %758 = vmatmul.mubr.bf16.gmra.mxu0 %v688
        %v759 = vpop.f32.mrf.mxu0
        %v760 = vadd.f32 %v634, %v759
        %v761 = vpop.f32.mrf.mxu0
        %v762 = vadd.f32 %v638, %v761
        %v763 = vpop.f32.mrf.mxu0
        %v764 = vadd.f32 %v634, %v763
        %v765 = vpop.f32.mrf.mxu0
        %v766 = vadd.f32 %v638, %v765
        %767 = vmatprep.mubr.bf16.mxu0 0
        %768 = vmatmul.mubr.bf16.gmra.mxu0 %v691
        %v769 = vpop.f32.mrf.mxu0
        %v770 = vadd.f32 %v634, %v769
        %v771 = vpop.f32.mrf.mxu0
        %v772 = vadd.f32 %v638, %v771
        %v773 = vpop.f32.mrf.mxu0
        %v774 = vadd.f32 %v634, %v773
        %v775 = vpop.f32.mrf.mxu0
        %v776 = vadd.f32 %v638, %v775
        %777 = vmatprep.mubr.bf16.mxu0 0
        %778 = vmatmul.mubr.bf16.gmra.mxu0 %v694
        %v779 = vpop.f32.mrf.mxu0
        %v780 = vadd.f32 %v634, %v779
        %v781 = vpop.f32.mrf.mxu0
        %v782 = vadd.f32 %v638, %v781
        %v783 = vpop.f32.mrf.mxu0
        %v784 = vadd.f32 %v634, %v783
        %v785 = vpop.f32.mrf.mxu0
        %v786 = vadd.f32 %v638, %v785
        %787 = vmatprep.mubr.bf16.mxu0 0
        %788 = vmatmul.mubr.bf16.gmra.mxu0 %v697
        %v789 = vpop.f32.mrf.mxu0
        %v790 = vadd.f32 %v634, %v789
        %v791 = vpop.f32.mrf.mxu0
        %v792 = vadd.f32 %v638, %v791
        %v793 = vpop.f32.mrf.mxu0
        %v794 = vadd.f32 %v634, %v793
        %v795 = vpop.f32.mrf.mxu0
        %v796 = vadd.f32 %v638, %v795
        %797 = vmatprep.mubr.bf16.mxu0 0
        %798 = vmatmul.mubr.bf16.gmra.mxu0 %v700
        %v799 = vpop.f32.mrf.mxu0
        %v800 = vadd.f32 %v634, %v799
        %v801 = vpop.f32.mrf.mxu0
        %v802 = vadd.f32 %v638, %v801
        %v803 = vpop.f32.mrf.mxu0
        %v804 = vadd.f32 %v634, %v803
        %v805 = vpop.f32.mrf.mxu0
        %v806 = vadd.f32 %v638, %v805
        %807 = vmatprep.mubr.bf16.mxu0 0
        %808 = vmatmul.mubr.bf16.gmra.mxu0 %v703
        %v809 = vpop.f32.mrf.mxu0
        %v810 = vadd.f32 %v634, %v809
        %v811 = vpop.f32.mrf.mxu0
        %v812 = vadd.f32 %v638, %v811
        %v813 = vpop.f32.mrf.mxu0
        %v814 = vadd.f32 %v634, %v813
        %v815 = vpop.f32.mrf.mxu0
        %v816 = vadd.f32 %v638, %v815
        %817 = vdwg.mxu0
        %v818 = vpack.c.bf16 %v744, %v740
        %v819 = vpack.c.bf16 %v754, %v750
        %v820 = vpack.c.bf16 %v764, %v760
        %v821 = vpack.c.bf16 %v774, %v770
        %v822 = vpack.c.bf16 %v784, %v780
        %v823 = vpack.c.bf16 %v794, %v790
        %v824 = vpack.c.bf16 %v804, %v800
        %v825 = vpack.c.bf16 %v814, %v810
        %v834 = vunpack.c.l.b16 %v818
        %v835 = vunpack.c.h.b16 %v818
        %v836 = vunpack.c.l.b16 %v819
        %v837 = vunpack.c.h.b16 %v819
        %v838 = vunpack.c.l.b16 %v820
        %v839 = vunpack.c.h.b16 %v820
        %v840 = vunpack.c.l.b16 %v821
        %v841 = vunpack.c.h.b16 %v821
        %v842 = vunpack.c.l.b16 %v822
        %v843 = vunpack.c.h.b16 %v822
        %v844 = vunpack.c.l.b16 %v823
        %v845 = vunpack.c.h.b16 %v823
        %v846 = vunpack.c.l.b16 %v824
        %v847 = vunpack.c.h.b16 %v824
        %v848 = vunpack.c.l.b16 %v825
        %v849 = vunpack.c.h.b16 %v825
        %v850 = vpack.c.b16 %v834, %v834
        %v851 = vpack.c.b16 %v835, %v835
        %v852 = vpack.c.b16 %v836, %v836
        %v853 = vpack.c.b16 %v837, %v837
        %v854 = vpack.c.b16 %v838, %v838
        %v855 = vpack.c.b16 %v839, %v839
        %v856 = vpack.c.b16 %v840, %v840
        %v857 = vpack.c.b16 %v841, %v841
        %v858 = vpack.c.b16 %v842, %v842
        %v859 = vpack.c.b16 %v843, %v843
        %v860 = vpack.c.b16 %v844, %v844
        %v861 = vpack.c.b16 %v845, %v845
        %v862 = vpack.c.b16 %v846, %v846
        %v863 = vpack.c.b16 %v847, %v847
        %v864 = vpack.c.b16 %v848, %v848
        %v865 = vpack.c.b16 %v849, %v849
        %vm882 = vcmask 519168
        %883 = vst.msk [vmem:[%s337] sm:$0xf] %vm882, %v850
        %884 = vst.msk [vmem:[%s337 + $0x4] sm:$0xf] %vm882, %v851
        %885 = vst.msk [vmem:[%s337 + $0x8] sm:$0xf] %vm882, %v852
        %886 = vst.msk [vmem:[%s337 + $0xc] sm:$0xf] %vm882, %v853
        %887 = vst.msk [vmem:[%s337 + $0x10] sm:$0xf] %vm882, %v854
        %888 = vst.msk [vmem:[%s337 + $0x14] sm:$0xf] %vm882, %v855
        %889 = vst.msk [vmem:[%s337 + $0x18] sm:$0xf] %vm882, %v856
        %890 = vst.msk [vmem:[%s337 + $0x1c] sm:$0xf] %vm882, %v857
        %891 = vst.msk [vmem:[%s337 + $0x20] sm:$0xf] %vm882, %v858
        %892 = vst.msk [vmem:[%s337 + $0x24] sm:$0xf] %vm882, %v859
        %893 = vst.msk [vmem:[%s337 + $0x28] sm:$0xf] %vm882, %v860
        %894 = vst.msk [vmem:[%s337 + $0x2c] sm:$0xf] %vm882, %v861
        %895 = vst.msk [vmem:[%s337 + $0x30] sm:$0xf] %vm882, %v862
        %896 = vst.msk [vmem:[%s337 + $0x34] sm:$0xf] %vm882, %v863
        %897 = vst.msk [vmem:[%s337 + $0x38] sm:$0xf] %vm882, %v864
        %898 = vst.msk [vmem:[%s337 + $0x3c] sm:$0xf] %vm882, %v865
        %915 = vrot.lane.b32.xlu0 %v740, 64
        %v916 = vpop.permute.xlu0 %915
        %917 = vrot.lane.b32.xlu0 %v744, 64
        %v918 = vpop.permute.xlu0 %917
        %919 = vrot.lane.b32.xlu0 %v750, 64
        %v920 = vpop.permute.xlu0 %919
        %921 = vrot.lane.b32.xlu0 %v754, 64
        %v922 = vpop.permute.xlu0 %921
        %923 = vrot.lane.b32.xlu0 %v760, 64
        %v924 = vpop.permute.xlu0 %923
        %925 = vrot.lane.b32.xlu0 %v764, 64
        %v926 = vpop.permute.xlu0 %925
        %927 = vrot.lane.b32.xlu0 %v770, 64
        %v928 = vpop.permute.xlu0 %927
        %929 = vrot.lane.b32.xlu0 %v774, 64
        %v930 = vpop.permute.xlu0 %929
        %931 = vrot.lane.b32.xlu0 %v780, 64
        %v932 = vpop.permute.xlu0 %931
        %933 = vrot.lane.b32.xlu0 %v784, 64
        %v934 = vpop.permute.xlu0 %933
        %935 = vrot.lane.b32.xlu0 %v790, 64
        %v936 = vpop.permute.xlu0 %935
        %937 = vrot.lane.b32.xlu0 %v794, 64
        %v938 = vpop.permute.xlu0 %937
        %939 = vrot.lane.b32.xlu0 %v800, 64
        %v940 = vpop.permute.xlu0 %939
        %941 = vrot.lane.b32.xlu0 %v804, 64
        %v942 = vpop.permute.xlu0 %941
        %943 = vrot.lane.b32.xlu0 %v810, 64
        %v944 = vpop.permute.xlu0 %943
        %945 = vrot.lane.b32.xlu0 %v814, 64
        %v946 = vpop.permute.xlu0 %945
        %963 = vxpose.xlu0.b32.start [1/16] %v916, 128
        %964 = vxpose.xlu0.b32.cont [2/16] %v918, 128
        %965 = vxpose.xlu0.b32.cont [3/16] %v920, 128
        %966 = vxpose.xlu0.b32.cont [4/16] %v922, 128
        %967 = vxpose.xlu0.b32.cont [5/16] %v924, 128
        %968 = vxpose.xlu0.b32.cont [6/16] %v926, 128
        %969 = vxpose.xlu0.b32.cont [7/16] %v928, 128
        %970 = vxpose.xlu0.b32.cont [8/16] %v930, 128
        %971 = vxpose.xlu0.b32.cont [9/16] %v932, 128
        %972 = vxpose.xlu0.b32.cont [10/16] %v934, 128
        %973 = vxpose.xlu0.b32.cont [11/16] %v936, 128
        %974 = vxpose.xlu0.b32.cont [12/16] %v938, 128
        %975 = vxpose.xlu0.b32.cont [13/16] %v940, 128
        %976 = vxpose.xlu0.b32.cont [14/16] %v942, 128
        %977 = vxpose.xlu0.b32.cont [15/16] %v944, 128
        %978 = vxpose.xlu0.b32.end [16/16] %v946, 128
        %v979 = vpop.trf.xlu0
        %v980 = vpop.trf.xlu0
        %v981 = vpop.trf.xlu0
        %v982 = vpop.trf.xlu0
        %v983 = vpop.trf.xlu0
        %v984 = vpop.trf.xlu0
        %v985 = vpop.trf.xlu0
        %v986 = vpop.trf.xlu0
        %v987 = vpop.trf.xlu0
        %v988 = vpop.trf.xlu0
        %v989 = vpop.trf.xlu0
        %v990 = vpop.trf.xlu0
        %v991 = vpop.trf.xlu0
        %v992 = vpop.trf.xlu0
        %v993 = vpop.trf.xlu0
        %v994 = vpop.trf.xlu0
        %v995 = vpack.c.bf16 %v980, %v979
        %v997 = vunpack.c.l.b16 %v995
        %v998 = vunpack.c.h.b16 %v995
        %v999 = vpack.c.b16 %v997, %v997
        %v1000 = vpack.c.b16 %v998, %v998
        %1003 = vst [vmem:[%s312] sm:$0xf] %v999
        %1004 = vst [vmem:[%s312 + $0x4] sm:$0xf] %v1000
        %v1005 = vpack.c.bf16 %v982, %v981
        %v1007 = vunpack.c.l.b16 %v1005
        %v1008 = vunpack.c.h.b16 %v1005
        %v1009 = vpack.c.b16 %v1007, %v1007
        %v1010 = vpack.c.b16 %v1008, %v1008
        %s1013 = scalar_lea.vmem %s312, 8 [#allocation2]
        %1014 = vst [vmem:[%s1013] sm:$0xf] %v1009
        %1015 = vst [vmem:[%s1013 + $0x4] sm:$0xf] %v1010
        %v1016 = vpack.c.bf16 %v984, %v983
        %v1018 = vunpack.c.l.b16 %v1016
        %v1019 = vunpack.c.h.b16 %v1016
        %v1020 = vpack.c.b16 %v1018, %v1018
        %v1021 = vpack.c.b16 %v1019, %v1019
        %s1024 = scalar_lea.vmem %s312, 16 [#allocation2]
        %1025 = vst [vmem:[%s1024] sm:$0xf] %v1020
        %1026 = vst [vmem:[%s1024 + $0x4] sm:$0xf] %v1021
        %v1027 = vpack.c.bf16 %v986, %v985
        %v1029 = vunpack.c.l.b16 %v1027
        %v1030 = vunpack.c.h.b16 %v1027
        %v1031 = vpack.c.b16 %v1029, %v1029
        %v1032 = vpack.c.b16 %v1030, %v1030
        %s1035 = scalar_lea.vmem %s312, 24 [#allocation2]
        %1036 = vst [vmem:[%s1035] sm:$0xf] %v1031
        %1037 = vst [vmem:[%s1035 + $0x4] sm:$0xf] %v1032
        %v1038 = vpack.c.bf16 %v746, %v742
        %v1039 = vpack.c.bf16 %v756, %v752
        %v1040 = vpack.c.bf16 %v766, %v762
        %v1041 = vpack.c.bf16 %v776, %v772
        %v1042 = vpack.c.bf16 %v786, %v782
        %v1043 = vpack.c.bf16 %v796, %v792
        %v1044 = vpack.c.bf16 %v806, %v802
        %v1045 = vpack.c.bf16 %v816, %v812
        %v1054 = vunpack.c.l.b16 %v1038
        %v1055 = vunpack.c.h.b16 %v1038
        %v1056 = vunpack.c.l.b16 %v1039
        %v1057 = vunpack.c.h.b16 %v1039
        %v1058 = vunpack.c.l.b16 %v1040
        %v1059 = vunpack.c.h.b16 %v1040
        %v1060 = vunpack.c.l.b16 %v1041
        %v1061 = vunpack.c.h.b16 %v1041
        %v1062 = vunpack.c.l.b16 %v1042
        %v1063 = vunpack.c.h.b16 %v1042
        %v1064 = vunpack.c.l.b16 %v1043
        %v1065 = vunpack.c.h.b16 %v1043
        %v1066 = vunpack.c.l.b16 %v1044
        %v1067 = vunpack.c.h.b16 %v1044
        %v1068 = vunpack.c.l.b16 %v1045
        %v1069 = vunpack.c.h.b16 %v1045
        %v1070 = vpack.c.b16 %v1054, %v1054
        %v1071 = vpack.c.b16 %v1055, %v1055
        %v1072 = vpack.c.b16 %v1056, %v1056
        %v1073 = vpack.c.b16 %v1057, %v1057
        %v1074 = vpack.c.b16 %v1058, %v1058
        %v1075 = vpack.c.b16 %v1059, %v1059
        %v1076 = vpack.c.b16 %v1060, %v1060
        %v1077 = vpack.c.b16 %v1061, %v1061
        %v1078 = vpack.c.b16 %v1062, %v1062
        %v1079 = vpack.c.b16 %v1063, %v1063
        %v1080 = vpack.c.b16 %v1064, %v1064
        %v1081 = vpack.c.b16 %v1065, %v1065
        %v1082 = vpack.c.b16 %v1066, %v1066
        %v1083 = vpack.c.b16 %v1067, %v1067
        %v1084 = vpack.c.b16 %v1068, %v1068
        %v1085 = vpack.c.b16 %v1069, %v1069
        %vm1102 = vcmask 125952
        %1103 = vst.msk [vmem:[%s318] sm:$0xf] %vm1102, %v1070
        %1104 = vst.msk [vmem:[%s318 + $0x4] sm:$0xf] %vm1102, %v1071
        %1105 = vst.msk [vmem:[%s318 + $0x8] sm:$0xf] %vm1102, %v1072
        %1106 = vst.msk [vmem:[%s318 + $0xc] sm:$0xf] %vm1102, %v1073
        %1107 = vst.msk [vmem:[%s318 + $0x10] sm:$0xf] %vm1102, %v1074
        %1108 = vst.msk [vmem:[%s318 + $0x14] sm:$0xf] %vm1102, %v1075
        %1109 = vst.msk [vmem:[%s318 + $0x18] sm:$0xf] %vm1102, %v1076
        %1110 = vst.msk [vmem:[%s318 + $0x1c] sm:$0xf] %vm1102, %v1077
        %1111 = vst.msk [vmem:[%s318 + $0x20] sm:$0xf] %vm1102, %v1078
        %1112 = vst.msk [vmem:[%s318 + $0x24] sm:$0xf] %vm1102, %v1079
        %1113 = vst.msk [vmem:[%s318 + $0x28] sm:$0xf] %vm1102, %v1080
        %1114 = vst.msk [vmem:[%s318 + $0x2c] sm:$0xf] %vm1102, %v1081
        %1115 = vst.msk [vmem:[%s318 + $0x30] sm:$0xf] %vm1102, %v1082
        %1116 = vst.msk [vmem:[%s318 + $0x34] sm:$0xf] %vm1102, %v1083
        %1117 = vst.msk [vmem:[%s318 + $0x38] sm:$0xf] %vm1102, %v1084
        %1118 = vst.msk [vmem:[%s318 + $0x3c] sm:$0xf] %vm1102, %v1085
        %1119 = vrot.lane.b32.xlu0 %v1070, 112
        %v1120 = vpop.permute.xlu0 %1119
        %1121 = vrot.lane.b32.xlu0 %v1071, 112
        %v1122 = vpop.permute.xlu0 %1121
        %1123 = vrot.lane.b32.xlu0 %v1072, 112
        %v1124 = vpop.permute.xlu0 %1123
        %1125 = vrot.lane.b32.xlu0 %v1073, 112
        %v1126 = vpop.permute.xlu0 %1125
        %1127 = vrot.lane.b32.xlu0 %v1074, 112
        %v1128 = vpop.permute.xlu0 %1127
        %1129 = vrot.lane.b32.xlu0 %v1075, 112
        %v1130 = vpop.permute.xlu0 %1129
        %1131 = vrot.lane.b32.xlu0 %v1076, 112
        %v1132 = vpop.permute.xlu0 %1131
        %1133 = vrot.lane.b32.xlu0 %v1077, 112
        %v1134 = vpop.permute.xlu0 %1133
        %1135 = vrot.lane.b32.xlu0 %v1078, 112
        %v1136 = vpop.permute.xlu0 %1135
        %1137 = vrot.lane.b32.xlu0 %v1079, 112
        %v1138 = vpop.permute.xlu0 %1137
        %1139 = vrot.lane.b32.xlu0 %v1080, 112
        %v1140 = vpop.permute.xlu0 %1139
        %1141 = vrot.lane.b32.xlu0 %v1081, 112
        %v1142 = vpop.permute.xlu0 %1141
        %1143 = vrot.lane.b32.xlu0 %v1082, 112
        %v1144 = vpop.permute.xlu0 %1143
        %1145 = vrot.lane.b32.xlu0 %v1083, 112
        %v1146 = vpop.permute.xlu0 %1145
        %1147 = vrot.lane.b32.xlu0 %v1084, 112
        %v1148 = vpop.permute.xlu0 %1147
        %1149 = vrot.lane.b32.xlu0 %v1085, 112
        %v1150 = vpop.permute.xlu0 %1149
        %s1167 = scalar_lea.vmem %s318, 64 [#allocation4]
        %1168 = vst.msk [vmem:[%s1167] sm:$0xf] %vm1102, %v1120
        %1169 = vst.msk [vmem:[%s1167 + $0x4] sm:$0xf] %vm1102, %v1122
        %1170 = vst.msk [vmem:[%s1167 + $0x8] sm:$0xf] %vm1102, %v1124
        %1171 = vst.msk [vmem:[%s1167 + $0xc] sm:$0xf] %vm1102, %v1126
        %1172 = vst.msk [vmem:[%s1167 + $0x10] sm:$0xf] %vm1102, %v1128
        %1173 = vst.msk [vmem:[%s1167 + $0x14] sm:$0xf] %vm1102, %v1130
        %1174 = vst.msk [vmem:[%s1167 + $0x18] sm:$0xf] %vm1102, %v1132
        %1175 = vst.msk [vmem:[%s1167 + $0x1c] sm:$0xf] %vm1102, %v1134
        %1176 = vst.msk [vmem:[%s1167 + $0x20] sm:$0xf] %vm1102, %v1136
        %1177 = vst.msk [vmem:[%s1167 + $0x24] sm:$0xf] %vm1102, %v1138
        %1178 = vst.msk [vmem:[%s1167 + $0x28] sm:$0xf] %vm1102, %v1140
        %1179 = vst.msk [vmem:[%s1167 + $0x2c] sm:$0xf] %vm1102, %v1142
        %1180 = vst.msk [vmem:[%s1167 + $0x30] sm:$0xf] %vm1102, %v1144
        %1181 = vst.msk [vmem:[%s1167 + $0x34] sm:$0xf] %vm1102, %v1146
        %1182 = vst.msk [vmem:[%s1167 + $0x38] sm:$0xf] %vm1102, %v1148
        %1183 = vst.msk [vmem:[%s1167 + $0x3c] sm:$0xf] %vm1102, %v1150
        %1184 = vrot.lane.b32.xlu0 %v1070, 96
        %v1185 = vpop.permute.xlu0 %1184
        %1186 = vrot.lane.b32.xlu0 %v1071, 96
        %v1187 = vpop.permute.xlu0 %1186
        %1188 = vrot.lane.b32.xlu0 %v1072, 96
        %v1189 = vpop.permute.xlu0 %1188
        %1190 = vrot.lane.b32.xlu0 %v1073, 96
        %v1191 = vpop.permute.xlu0 %1190
        %1192 = vrot.lane.b32.xlu0 %v1074, 96
        %v1193 = vpop.permute.xlu0 %1192
        %1194 = vrot.lane.b32.xlu0 %v1075, 96
        %v1195 = vpop.permute.xlu0 %1194
        %1196 = vrot.lane.b32.xlu0 %v1076, 96
        %v1197 = vpop.permute.xlu0 %1196
        %1198 = vrot.lane.b32.xlu0 %v1077, 96
        %v1199 = vpop.permute.xlu0 %1198
        %1200 = vrot.lane.b32.xlu0 %v1078, 96
        %v1201 = vpop.permute.xlu0 %1200
        %1202 = vrot.lane.b32.xlu0 %v1079, 96
        %v1203 = vpop.permute.xlu0 %1202
        %1204 = vrot.lane.b32.xlu0 %v1080, 96
        %v1205 = vpop.permute.xlu0 %1204
        %1206 = vrot.lane.b32.xlu0 %v1081, 96
        %v1207 = vpop.permute.xlu0 %1206
        %1208 = vrot.lane.b32.xlu0 %v1082, 96
        %v1209 = vpop.permute.xlu0 %1208
        %1210 = vrot.lane.b32.xlu0 %v1083, 96
        %v1211 = vpop.permute.xlu0 %1210
        %1212 = vrot.lane.b32.xlu0 %v1084, 96
        %v1213 = vpop.permute.xlu0 %1212
        %1214 = vrot.lane.b32.xlu0 %v1085, 96
        %v1215 = vpop.permute.xlu0 %1214
        %s1232 = scalar_lea.vmem %s318, 128 [#allocation4]
        %1233 = vst.msk [vmem:[%s1232] sm:$0xf] %vm1102, %v1185
        %1234 = vst.msk [vmem:[%s1232 + $0x4] sm:$0xf] %vm1102, %v1187
        %1235 = vst.msk [vmem:[%s1232 + $0x8] sm:$0xf] %vm1102, %v1189
        %1236 = vst.msk [vmem:[%s1232 + $0xc] sm:$0xf] %vm1102, %v1191
        %1237 = vst.msk [vmem:[%s1232 + $0x10] sm:$0xf] %vm1102, %v1193
        %1238 = vst.msk [vmem:[%s1232 + $0x14] sm:$0xf] %vm1102, %v1195
        %1239 = vst.msk [vmem:[%s1232 + $0x18] sm:$0xf] %vm1102, %v1197
        %1240 = vst.msk [vmem:[%s1232 + $0x1c] sm:$0xf] %vm1102, %v1199
        %1241 = vst.msk [vmem:[%s1232 + $0x20] sm:$0xf] %vm1102, %v1201
        %1242 = vst.msk [vmem:[%s1232 + $0x24] sm:$0xf] %vm1102, %v1203
        %1243 = vst.msk [vmem:[%s1232 + $0x28] sm:$0xf] %vm1102, %v1205
        %1244 = vst.msk [vmem:[%s1232 + $0x2c] sm:$0xf] %vm1102, %v1207
        %1245 = vst.msk [vmem:[%s1232 + $0x30] sm:$0xf] %vm1102, %v1209
        %1246 = vst.msk [vmem:[%s1232 + $0x34] sm:$0xf] %vm1102, %v1211
        %1247 = vst.msk [vmem:[%s1232 + $0x38] sm:$0xf] %vm1102, %v1213
        %1248 = vst.msk [vmem:[%s1232 + $0x3c] sm:$0xf] %vm1102, %v1215
        %1249 = vrot.lane.b32.xlu0 %v1070, 80
        %v1250 = vpop.permute.xlu0 %1249
        %1251 = vrot.lane.b32.xlu0 %v1071, 80
        %v1252 = vpop.permute.xlu0 %1251
        %1253 = vrot.lane.b32.xlu0 %v1072, 80
        %v1254 = vpop.permute.xlu0 %1253
        %1255 = vrot.lane.b32.xlu0 %v1073, 80
        %v1256 = vpop.permute.xlu0 %1255
        %1257 = vrot.lane.b32.xlu0 %v1074, 80
        %v1258 = vpop.permute.xlu0 %1257
        %1259 = vrot.lane.b32.xlu0 %v1075, 80
        %v1260 = vpop.permute.xlu0 %1259
        %1261 = vrot.lane.b32.xlu0 %v1076, 80
        %v1262 = vpop.permute.xlu0 %1261
        %1263 = vrot.lane.b32.xlu0 %v1077, 80
        %v1264 = vpop.permute.xlu0 %1263
        %1265 = vrot.lane.b32.xlu0 %v1078, 80
        %v1266 = vpop.permute.xlu0 %1265
        %1267 = vrot.lane.b32.xlu0 %v1079, 80
        %v1268 = vpop.permute.xlu0 %1267
        %1269 = vrot.lane.b32.xlu0 %v1080, 80
        %v1270 = vpop.permute.xlu0 %1269
        %1271 = vrot.lane.b32.xlu0 %v1081, 80
        %v1272 = vpop.permute.xlu0 %1271
        %1273 = vrot.lane.b32.xlu0 %v1082, 80
        %v1274 = vpop.permute.xlu0 %1273
        %1275 = vrot.lane.b32.xlu0 %v1083, 80
        %v1276 = vpop.permute.xlu0 %1275
        %1277 = vrot.lane.b32.xlu0 %v1084, 80
        %v1278 = vpop.permute.xlu0 %1277
        %1279 = vrot.lane.b32.xlu0 %v1085, 80
        %v1280 = vpop.permute.xlu0 %1279
        %s1297 = scalar_lea.vmem %s318, 192 [#allocation4]
        %1298 = vst.msk [vmem:[%s1297] sm:$0xf] %vm1102, %v1250
        %1299 = vst.msk [vmem:[%s1297 + $0x4] sm:$0xf] %vm1102, %v1252
        %1300 = vst.msk [vmem:[%s1297 + $0x8] sm:$0xf] %vm1102, %v1254
        %1301 = vst.msk [vmem:[%s1297 + $0xc] sm:$0xf] %vm1102, %v1256
        %1302 = vst.msk [vmem:[%s1297 + $0x10] sm:$0xf] %vm1102, %v1258
        %1303 = vst.msk [vmem:[%s1297 + $0x14] sm:$0xf] %vm1102, %v1260
        %1304 = vst.msk [vmem:[%s1297 + $0x18] sm:$0xf] %vm1102, %v1262
        %1305 = vst.msk [vmem:[%s1297 + $0x1c] sm:$0xf] %vm1102, %v1264
        %1306 = vst.msk [vmem:[%s1297 + $0x20] sm:$0xf] %vm1102, %v1266
        %1307 = vst.msk [vmem:[%s1297 + $0x24] sm:$0xf] %vm1102, %v1268
        %1308 = vst.msk [vmem:[%s1297 + $0x28] sm:$0xf] %vm1102, %v1270
        %1309 = vst.msk [vmem:[%s1297 + $0x2c] sm:$0xf] %vm1102, %v1272
        %1310 = vst.msk [vmem:[%s1297 + $0x30] sm:$0xf] %vm1102, %v1274
        %1311 = vst.msk [vmem:[%s1297 + $0x34] sm:$0xf] %vm1102, %v1276
        %1312 = vst.msk [vmem:[%s1297 + $0x38] sm:$0xf] %vm1102, %v1278
        %1313 = vst.msk [vmem:[%s1297 + $0x3c] sm:$0xf] %vm1102, %v1280
        %s1314 = smul.u32 16, %s27
        %p1315 = scmp.lt.s32.totalorder %s26, 1
        %s1316 = scalar_select %p1315, %s26, 1
        %p1317 = scmp.lt.s32.totalorder %s1314, 31
        %s1318 = scalar_select %p1317, %s1314, 31
        %s1319 = smul.addr %s1316, 32
        %s1320 = sadd.s32 %s1318, %s1319
        %s1321 = smul.addr %s1320, 4
        %s1322 = scalar_lea.vmem %s5, %s1321
        %s1323 = sand.u32 %s184, 1
        %s1324 = scalar_lea.sflag [#allocation3], %s1323
        %s1325 = sand.u32 %s184, 1
        %s1326 = smul.addr %s1325, 32
        %s1327 = scalar_lea.vmem [#allocation2], %s1326
        %s1328 = sand.u32 %s212, 1
        %s1329 = sand.u32 %s212, 1
        %s1330 = smul.addr %s1329, 256
        %s1331 = scalar_lea.vmem [#allocation4], %s1330
        // Predicated region
        $region41: #{tpu_custom_call.1} parent=39 // pred_check
          %p1332 = pneg %p166
        $region42: #{tpu_custom_call.1} parent=39 // pred_check_branch
          %1334 = sbr.rel (%p1332) target = $region44
        $region43: #{tpu_custom_call.1} parent=39 // pred_region
          %s1335 = smul.u32 16, %s27
        $region44: #{tpu_custom_call.1} parent=39 // pred_fallthru
          _
        // Predicated region
        $region45: #{tpu_custom_call.1} parent=39 // pred_check
          %p1336 = pneg %p194
        $region46: #{tpu_custom_call.1} parent=39 // pred_check_branch
          %1338 = sbr.rel (%p1336) target = $region48
        $region47: #{tpu_custom_call.1} parent=39 // pred_region
          %s1340 = ssub.s32 512, 512
          %1341 = vsyncadd %s1324, %s1340
          %s1342 = smul.addr %s26, 16
          %s1343 = sadd.s32 %s27, %s1342
          %s1344 = smul.addr %s1343, 64
          %s1345 = scalar_lea.hbm %s6, %s1344
          %s1346 = sshll.u32 %s1327, 4
          %s1347 = int_to_ptr.vmem [resolvable:$true] %s1346
          %1352 = dma.vmem_to_hbm [thread:$0]  %s1347, 512, %s1345, %s1324, 64, 128, 4
        $region48: #{tpu_custom_call.1} parent=39 // pred_fallthru
          _
        // Predicated region
        $region49: #{tpu_custom_call.1} parent=39 // pred_check
          %p1353 = pneg %p222
        $region50: #{tpu_custom_call.1} parent=39 // pred_check_branch
          %1355 = sbr.rel (%p1353) target = $region52
        $region51: #{tpu_custom_call.1} parent=39 // pred_region
          %s1356 = smul.u32 16, %s27
          %s1357 = smul.addr %s26, 128
          %s1358 = sadd.s32 %s1356, %s1357
          %s1359 = smul.addr %s1358, 4
          %s1360 = scalar_lea.vmem %s7, %s1359
          // Predicated region
          $region53: #{tpu_custom_call.1} parent=51 // pred_check
            _
          $region54: #{tpu_custom_call.1} parent=51 // pred_check_branch
            %1362 = sbr.rel (0) target = $region56
          $region55: #{tpu_custom_call.1} parent=51 // pred_region
            // Predicated region
            $region57: #{tpu_custom_call.1} parent=55 // pred_check
              _
            $region58: #{tpu_custom_call.1} parent=55 // pred_check_branch
              %1364 = sbr.rel target = $region60
            $region59: #{tpu_custom_call.1} parent=55 // pred_region
              // Predicated region
              $region72: #{tpu_custom_call.1} parent=59 // pred_check
                _
              $region73: #{tpu_custom_call.1} parent=59 // pred_check_branch
                %1506 = sbr.rel (0) target = $region75
              $region74: #{tpu_custom_call.1} parent=59 // pred_region
                loop: start=0, step=1, limit=1
                $region76: #{tpu_custom_call.1} parent=74 // loop_pre_header
                  _
                $region77: #{tpu_custom_call.1} parent=74 // loop_header
                  %s1508 = sphi 0, %s1512
                  %p1509 = scmp.ge.s32.totalorder %s1508, 1
                  %s1513 = sphi %s1331, %s1331
                  %s1514 = sphi %s1360, %s1360
                $region78: #{tpu_custom_call.1} parent=74 // loop_header_branch
                  %1511 = sbr.rel (%p1509) target = $region82
                $region79: #{tpu_custom_call.1} parent=74 // loop_body
                  _
                $region80: #{tpu_custom_call.1} parent=74 // loop_footer
                  %s1512 = sadd.s32 1, %s1508
                $region81: #{tpu_custom_call.1} parent=74 // loop_footer_branch
                  %1507 = sbr.rel target = $region77
                $region82: #{tpu_custom_call.1} parent=74 // loop_exit
                  _
                %s1516 = ssub.s32 16, 1
                loop: start=0, step=1, limit=1
                $region83: #{tpu_custom_call.1} parent=74 // loop_pre_header
                  _
                $region84: #{tpu_custom_call.1} parent=74 // loop_header
                  %s1518 = sphi 0, %s1522
                  %p1519 = scmp.ge.s32.totalorder %s1518, 1
                  %s1523 = sphi %s1331, %s1331
                  %s1524 = sphi %s1360, %s1360
                $region85: #{tpu_custom_call.1} parent=74 // loop_header_branch
                  %1521 = sbr.rel (%p1519) target = $region89
                $region86: #{tpu_custom_call.1} parent=74 // loop_body
                  %v1525 = vld [vmem:[%s1523] sm:%s1516]
                  %1526 = vst [vmem:[%s1524] sm:%s1516] %v1525
                  %v1527 = vld [vmem:[%s1523 + $0x4] sm:%s1516]
                  %1528 = vst [vmem:[%s1524 + $0x4] sm:%s1516] %v1527
                  %v1529 = vld [vmem:[%s1523 + $0x8] sm:%s1516]
                  %1530 = vst [vmem:[%s1524 + $0x8] sm:%s1516] %v1529
                  %v1531 = vld [vmem:[%s1523 + $0xc] sm:%s1516]
                  %1532 = vst [vmem:[%s1524 + $0xc] sm:%s1516] %v1531
                  %v1533 = vld [vmem:[%s1523 + $0x10] sm:%s1516]
                  %1534 = vst [vmem:[%s1524 + $0x10] sm:%s1516] %v1533
                  %v1535 = vld [vmem:[%s1523 + $0x14] sm:%s1516]
                  %1536 = vst [vmem:[%s1524 + $0x14] sm:%s1516] %v1535
                  %v1537 = vld [vmem:[%s1523 + $0x18] sm:%s1516]
                  %1538 = vst [vmem:[%s1524 + $0x18] sm:%s1516] %v1537
                  %v1539 = vld [vmem:[%s1523 + $0x1c] sm:%s1516]
                  %1540 = vst [vmem:[%s1524 + $0x1c] sm:%s1516] %v1539
                  %v1541 = vld [vmem:[%s1523 + $0x20] sm:%s1516]
                  %1542 = vst [vmem:[%s1524 + $0x20] sm:%s1516] %v1541
                  %v1543 = vld [vmem:[%s1523 + $0x24] sm:%s1516]
                  %1544 = vst [vmem:[%s1524 + $0x24] sm:%s1516] %v1543
                  %v1545 = vld [vmem:[%s1523 + $0x28] sm:%s1516]
                  %1546 = vst [vmem:[%s1524 + $0x28] sm:%s1516] %v1545
                  %v1547 = vld [vmem:[%s1523 + $0x2c] sm:%s1516]
                  %1548 = vst [vmem:[%s1524 + $0x2c] sm:%s1516] %v1547
                  %v1549 = vld [vmem:[%s1523 + $0x30] sm:%s1516]
                  %1550 = vst [vmem:[%s1524 + $0x30] sm:%s1516] %v1549
                  %v1551 = vld [vmem:[%s1523 + $0x34] sm:%s1516]
                  %1552 = vst [vmem:[%s1524 + $0x34] sm:%s1516] %v1551
                  %v1553 = vld [vmem:[%s1523 + $0x38] sm:%s1516]
                  %1554 = vst [vmem:[%s1524 + $0x38] sm:%s1516] %v1553
                  %v1555 = vld [vmem:[%s1523 + $0x3c] sm:%s1516]
                  %1556 = vst [vmem:[%s1524 + $0x3c] sm:%s1516] %v1555
                  %v1557 = vld [vmem:[%s1523 + $0x40] sm:%s1516]
                  %1558 = vst [vmem:[%s1524 + $0x80] sm:%s1516] %v1557
                  %v1559 = vld [vmem:[%s1523 + $0x44] sm:%s1516]
                  %1560 = vst [vmem:[%s1524 + $0x84] sm:%s1516] %v1559
                  %v1561 = vld [vmem:[%s1523 + $0x48] sm:%s1516]
                  %1562 = vst [vmem:[%s1524 + $0x88] sm:%s1516] %v1561
                  %v1563 = vld [vmem:[%s1523 + $0x4c] sm:%s1516]
                  %1564 = vst [vmem:[%s1524 + $0x8c] sm:%s1516] %v1563
                  %v1565 = vld [vmem:[%s1523 + $0x50] sm:%s1516]
                  %1566 = vst [vmem:[%s1524 + $0x90] sm:%s1516] %v1565
                  %v1567 = vld [vmem:[%s1523 + $0x54] sm:%s1516]
                  %1568 = vst [vmem:[%s1524 + $0x94] sm:%s1516] %v1567
                  %v1569 = vld [vmem:[%s1523 + $0x58] sm:%s1516]
                  %1570 = vst [vmem:[%s1524 + $0x98] sm:%s1516] %v1569
                  %v1571 = vld [vmem:[%s1523 + $0x5c] sm:%s1516]
                  %1572 = vst [vmem:[%s1524 + $0x9c] sm:%s1516] %v1571
                  %v1573 = vld [vmem:[%s1523 + $0x60] sm:%s1516]
                  %1574 = vst [vmem:[%s1524 + $0xa0] sm:%s1516] %v1573
                  %v1575 = vld [vmem:[%s1523 + $0x64] sm:%s1516]
                  %1576 = vst [vmem:[%s1524 + $0xa4] sm:%s1516] %v1575
                  %v1577 = vld [vmem:[%s1523 + $0x68] sm:%s1516]
                  %1578 = vst [vmem:[%s1524 + $0xa8] sm:%s1516] %v1577
                  %v1579 = vld [vmem:[%s1523 + $0x6c] sm:%s1516]
                  %1580 = vst [vmem:[%s1524 + $0xac] sm:%s1516] %v1579
                  %v1581 = vld [vmem:[%s1523 + $0x70] sm:%s1516]
                  %1582 = vst [vmem:[%s1524 + $0xb0] sm:%s1516] %v1581
                  %v1583 = vld [vmem:[%s1523 + $0x74] sm:%s1516]
                  %1584 = vst [vmem:[%s1524 + $0xb4] sm:%s1516] %v1583
                  %v1585 = vld [vmem:[%s1523 + $0x78] sm:%s1516]
                  %1586 = vst [vmem:[%s1524 + $0xb8] sm:%s1516] %v1585
                  %v1587 = vld [vmem:[%s1523 + $0x7c] sm:%s1516]
                  %1588 = vst [vmem:[%s1524 + $0xbc] sm:%s1516] %v1587
                  %v1589 = vld [vmem:[%s1523 + $0x80] sm:%s1516]
                  %1590 = vst [vmem:[%s1524 + $0x100] sm:%s1516] %v1589
                  %v1591 = vld [vmem:[%s1523 + $0x84] sm:%s1516]
                  %1592 = vst [vmem:[%s1524 + $0x104] sm:%s1516] %v1591
                  %v1593 = vld [vmem:[%s1523 + $0x88] sm:%s1516]
                  %1594 = vst [vmem:[%s1524 + $0x108] sm:%s1516] %v1593
                  %v1595 = vld [vmem:[%s1523 + $0x8c] sm:%s1516]
                  %1596 = vst [vmem:[%s1524 + $0x10c] sm:%s1516] %v1595
                  %v1597 = vld [vmem:[%s1523 + $0x90] sm:%s1516]
                  %1598 = vst [vmem:[%s1524 + $0x110] sm:%s1516] %v1597
                  %v1599 = vld [vmem:[%s1523 + $0x94] sm:%s1516]
                  %1600 = vst [vmem:[%s1524 + $0x114] sm:%s1516] %v1599
                  %v1601 = vld [vmem:[%s1523 + $0x98] sm:%s1516]
                  %1602 = vst [vmem:[%s1524 + $0x118] sm:%s1516] %v1601
                  %v1603 = vld [vmem:[%s1523 + $0x9c] sm:%s1516]
                  %1604 = vst [vmem:[%s1524 + $0x11c] sm:%s1516] %v1603
                  %v1605 = vld [vmem:[%s1523 + $0xa0] sm:%s1516]
                  %1606 = vst [vmem:[%s1524 + $0x120] sm:%s1516] %v1605
                  %v1607 = vld [vmem:[%s1523 + $0xa4] sm:%s1516]
                  %1608 = vst [vmem:[%s1524 + $0x124] sm:%s1516] %v1607
                  %v1609 = vld [vmem:[%s1523 + $0xa8] sm:%s1516]
                  %1610 = vst [vmem:[%s1524 + $0x128] sm:%s1516] %v1609
                  %v1611 = vld [vmem:[%s1523 + $0xac] sm:%s1516]
                  %1612 = vst [vmem:[%s1524 + $0x12c] sm:%s1516] %v1611
                  %v1613 = vld [vmem:[%s1523 + $0xb0] sm:%s1516]
                  %1614 = vst [vmem:[%s1524 + $0x130] sm:%s1516] %v1613
                  %v1615 = vld [vmem:[%s1523 + $0xb4] sm:%s1516]
                  %1616 = vst [vmem:[%s1524 + $0x134] sm:%s1516] %v1615
                  %v1617 = vld [vmem:[%s1523 + $0xb8] sm:%s1516]
                  %1618 = vst [vmem:[%s1524 + $0x138] sm:%s1516] %v1617
                  %v1619 = vld [vmem:[%s1523 + $0xbc] sm:%s1516]
                  %1620 = vst [vmem:[%s1524 + $0x13c] sm:%s1516] %v1619
                  %v1621 = vld [vmem:[%s1523 + $0xc0] sm:%s1516]
                  %1622 = vst [vmem:[%s1524 + $0x180] sm:%s1516] %v1621
                  %v1623 = vld [vmem:[%s1523 + $0xc4] sm:%s1516]
                  %1624 = vst [vmem:[%s1524 + $0x184] sm:%s1516] %v1623
                  %v1625 = vld [vmem:[%s1523 + $0xc8] sm:%s1516]
                  %1626 = vst [vmem:[%s1524 + $0x188] sm:%s1516] %v1625
                  %v1627 = vld [vmem:[%s1523 + $0xcc] sm:%s1516]
                  %1628 = vst [vmem:[%s1524 + $0x18c] sm:%s1516] %v1627
                  %v1629 = vld [vmem:[%s1523 + $0xd0] sm:%s1516]
                  %1630 = vst [vmem:[%s1524 + $0x190] sm:%s1516] %v1629
                  %v1631 = vld [vmem:[%s1523 + $0xd4] sm:%s1516]
                  %1632 = vst [vmem:[%s1524 + $0x194] sm:%s1516] %v1631
                  %v1633 = vld [vmem:[%s1523 + $0xd8] sm:%s1516]
                  %1634 = vst [vmem:[%s1524 + $0x198] sm:%s1516] %v1633
                  %v1635 = vld [vmem:[%s1523 + $0xdc] sm:%s1516]
                  %1636 = vst [vmem:[%s1524 + $0x19c] sm:%s1516] %v1635
                  %v1637 = vld [vmem:[%s1523 + $0xe0] sm:%s1516]
                  %1638 = vst [vmem:[%s1524 + $0x1a0] sm:%s1516] %v1637
                  %v1639 = vld [vmem:[%s1523 + $0xe4] sm:%s1516]
                  %1640 = vst [vmem:[%s1524 + $0x1a4] sm:%s1516] %v1639
                  %v1641 = vld [vmem:[%s1523 + $0xe8] sm:%s1516]
                  %1642 = vst [vmem:[%s1524 + $0x1a8] sm:%s1516] %v1641
                  %v1643 = vld [vmem:[%s1523 + $0xec] sm:%s1516]
                  %1644 = vst [vmem:[%s1524 + $0x1ac] sm:%s1516] %v1643
                  %v1645 = vld [vmem:[%s1523 + $0xf0] sm:%s1516]
                  %1646 = vst [vmem:[%s1524 + $0x1b0] sm:%s1516] %v1645
                  %v1647 = vld [vmem:[%s1523 + $0xf4] sm:%s1516]
                  %1648 = vst [vmem:[%s1524 + $0x1b4] sm:%s1516] %v1647
                  %v1649 = vld [vmem:[%s1523 + $0xf8] sm:%s1516]
                  %1650 = vst [vmem:[%s1524 + $0x1b8] sm:%s1516] %v1649
                  %v1651 = vld [vmem:[%s1523 + $0xfc] sm:%s1516]
                  %1652 = vst [vmem:[%s1524 + $0x1bc] sm:%s1516] %v1651
                $region87: #{tpu_custom_call.1} parent=74 // loop_footer
                  %s1522 = sadd.s32 1, %s1518
                $region88: #{tpu_custom_call.1} parent=74 // loop_footer_branch
                  %1517 = sbr.rel target = $region84
                $region89: #{tpu_custom_call.1} parent=74 // loop_exit
                  _
              $region75: #{tpu_custom_call.1} parent=59 // pred_fallthru
                _
            $region60: #{tpu_custom_call.1} parent=55 // pred_fallthru
              _
            // Predicated region
            $region61: #{tpu_custom_call.1} parent=55 // pred_check
              _
            $region62: #{tpu_custom_call.1} parent=55 // pred_check_branch
              %1366 = sbr.rel (0) target = $region64
            $region63: #{tpu_custom_call.1} parent=55 // pred_region
              %s1368 = ssub.s32 16, 1
              loop: start=0, step=1, limit=1
              $region65: #{tpu_custom_call.1} parent=63 // loop_pre_header
                _
              $region66: #{tpu_custom_call.1} parent=63 // loop_header
                %s1370 = sphi 0, %s1374
                %p1371 = scmp.ge.s32.totalorder %s1370, 1
                %s1375 = sphi %s1331, %s1331
                %s1376 = sphi %s1360, %s1360
              $region67: #{tpu_custom_call.1} parent=63 // loop_header_branch
                %1373 = sbr.rel (%p1371) target = $region71
              $region68: #{tpu_custom_call.1} parent=63 // loop_body
                %v1377 = vld [vmem:[%s1375] sm:%s1368]
                %1378 = vst [vmem:[%s1376] sm:%s1368] %v1377
                %v1379 = vld [vmem:[%s1375 + $0x4] sm:%s1368]
                %1380 = vst [vmem:[%s1376 + $0x4] sm:%s1368] %v1379
                %v1381 = vld [vmem:[%s1375 + $0x8] sm:%s1368]
                %1382 = vst [vmem:[%s1376 + $0x8] sm:%s1368] %v1381
                %v1383 = vld [vmem:[%s1375 + $0xc] sm:%s1368]
                %1384 = vst [vmem:[%s1376 + $0xc] sm:%s1368] %v1383
                %v1385 = vld [vmem:[%s1375 + $0x10] sm:%s1368]
                %1386 = vst [vmem:[%s1376 + $0x10] sm:%s1368] %v1385
                %v1387 = vld [vmem:[%s1375 + $0x14] sm:%s1368]
                %1388 = vst [vmem:[%s1376 + $0x14] sm:%s1368] %v1387
                %v1389 = vld [vmem:[%s1375 + $0x18] sm:%s1368]
                %1390 = vst [vmem:[%s1376 + $0x18] sm:%s1368] %v1389
                %v1391 = vld [vmem:[%s1375 + $0x1c] sm:%s1368]
                %1392 = vst [vmem:[%s1376 + $0x1c] sm:%s1368] %v1391
                %v1393 = vld [vmem:[%s1375 + $0x20] sm:%s1368]
                %1394 = vst [vmem:[%s1376 + $0x20] sm:%s1368] %v1393
                %v1395 = vld [vmem:[%s1375 + $0x24] sm:%s1368]
                %1396 = vst [vmem:[%s1376 + $0x24] sm:%s1368] %v1395
                %v1397 = vld [vmem:[%s1375 + $0x28] sm:%s1368]
                %1398 = vst [vmem:[%s1376 + $0x28] sm:%s1368] %v1397
                %v1399 = vld [vmem:[%s1375 + $0x2c] sm:%s1368]
                %1400 = vst [vmem:[%s1376 + $0x2c] sm:%s1368] %v1399
                %v1401 = vld [vmem:[%s1375 + $0x30] sm:%s1368]
                %1402 = vst [vmem:[%s1376 + $0x30] sm:%s1368] %v1401
                %v1403 = vld [vmem:[%s1375 + $0x34] sm:%s1368]
                %1404 = vst [vmem:[%s1376 + $0x34] sm:%s1368] %v1403
                %v1405 = vld [vmem:[%s1375 + $0x38] sm:%s1368]
                %1406 = vst [vmem:[%s1376 + $0x38] sm:%s1368] %v1405
                %v1407 = vld [vmem:[%s1375 + $0x3c] sm:%s1368]
                %1408 = vst [vmem:[%s1376 + $0x3c] sm:%s1368] %v1407
                %v1409 = vld [vmem:[%s1375 + $0x40] sm:%s1368]
                %1410 = vst [vmem:[%s1376 + $0x80] sm:%s1368] %v1409
                %v1411 = vld [vmem:[%s1375 + $0x44] sm:%s1368]
                %1412 = vst [vmem:[%s1376 + $0x84] sm:%s1368] %v1411
                %v1413 = vld [vmem:[%s1375 + $0x48] sm:%s1368]
                %1414 = vst [vmem:[%s1376 + $0x88] sm:%s1368] %v1413
                %v1415 = vld [vmem:[%s1375 + $0x4c] sm:%s1368]
                %1416 = vst [vmem:[%s1376 + $0x8c] sm:%s1368] %v1415
                %v1417 = vld [vmem:[%s1375 + $0x50] sm:%s1368]
                %1418 = vst [vmem:[%s1376 + $0x90] sm:%s1368] %v1417
                %v1419 = vld [vmem:[%s1375 + $0x54] sm:%s1368]
                %1420 = vst [vmem:[%s1376 + $0x94] sm:%s1368] %v1419
                %v1421 = vld [vmem:[%s1375 + $0x58] sm:%s1368]
                %1422 = vst [vmem:[%s1376 + $0x98] sm:%s1368] %v1421
                %v1423 = vld [vmem:[%s1375 + $0x5c] sm:%s1368]
                %1424 = vst [vmem:[%s1376 + $0x9c] sm:%s1368] %v1423
                %v1425 = vld [vmem:[%s1375 + $0x60] sm:%s1368]
                %1426 = vst [vmem:[%s1376 + $0xa0] sm:%s1368] %v1425
                %v1427 = vld [vmem:[%s1375 + $0x64] sm:%s1368]
                %1428 = vst [vmem:[%s1376 + $0xa4] sm:%s1368] %v1427
                %v1429 = vld [vmem:[%s1375 + $0x68] sm:%s1368]
                %1430 = vst [vmem:[%s1376 + $0xa8] sm:%s1368] %v1429
                %v1431 = vld [vmem:[%s1375 + $0x6c] sm:%s1368]
                %1432 = vst [vmem:[%s1376 + $0xac] sm:%s1368] %v1431
                %v1433 = vld [vmem:[%s1375 + $0x70] sm:%s1368]
                %1434 = vst [vmem:[%s1376 + $0xb0] sm:%s1368] %v1433
                %v1435 = vld [vmem:[%s1375 + $0x74] sm:%s1368]
                %1436 = vst [vmem:[%s1376 + $0xb4] sm:%s1368] %v1435
                %v1437 = vld [vmem:[%s1375 + $0x78] sm:%s1368]
                %1438 = vst [vmem:[%s1376 + $0xb8] sm:%s1368] %v1437
                %v1439 = vld [vmem:[%s1375 + $0x7c] sm:%s1368]
                %1440 = vst [vmem:[%s1376 + $0xbc] sm:%s1368] %v1439
                %v1441 = vld [vmem:[%s1375 + $0x80] sm:%s1368]
                %1442 = vst [vmem:[%s1376 + $0x100] sm:%s1368] %v1441
                %v1443 = vld [vmem:[%s1375 + $0x84] sm:%s1368]
                %1444 = vst [vmem:[%s1376 + $0x104] sm:%s1368] %v1443
                %v1445 = vld [vmem:[%s1375 + $0x88] sm:%s1368]
                %1446 = vst [vmem:[%s1376 + $0x108] sm:%s1368] %v1445
                %v1447 = vld [vmem:[%s1375 + $0x8c] sm:%s1368]
                %1448 = vst [vmem:[%s1376 + $0x10c] sm:%s1368] %v1447
                %v1449 = vld [vmem:[%s1375 + $0x90] sm:%s1368]
                %1450 = vst [vmem:[%s1376 + $0x110] sm:%s1368] %v1449
                %v1451 = vld [vmem:[%s1375 + $0x94] sm:%s1368]
                %1452 = vst [vmem:[%s1376 + $0x114] sm:%s1368] %v1451
                %v1453 = vld [vmem:[%s1375 + $0x98] sm:%s1368]
                %1454 = vst [vmem:[%s1376 + $0x118] sm:%s1368] %v1453
                %v1455 = vld [vmem:[%s1375 + $0x9c] sm:%s1368]
                %1456 = vst [vmem:[%s1376 + $0x11c] sm:%s1368] %v1455
                %v1457 = vld [vmem:[%s1375 + $0xa0] sm:%s1368]
                %1458 = vst [vmem:[%s1376 + $0x120] sm:%s1368] %v1457
                %v1459 = vld [vmem:[%s1375 + $0xa4] sm:%s1368]
                %1460 = vst [vmem:[%s1376 + $0x124] sm:%s1368] %v1459
                %v1461 = vld [vmem:[%s1375 + $0xa8] sm:%s1368]
                %1462 = vst [vmem:[%s1376 + $0x128] sm:%s1368] %v1461
                %v1463 = vld [vmem:[%s1375 + $0xac] sm:%s1368]
                %1464 = vst [vmem:[%s1376 + $0x12c] sm:%s1368] %v1463
                %v1465 = vld [vmem:[%s1375 + $0xb0] sm:%s1368]
                %1466 = vst [vmem:[%s1376 + $0x130] sm:%s1368] %v1465
                %v1467 = vld [vmem:[%s1375 + $0xb4] sm:%s1368]
                %1468 = vst [vmem:[%s1376 + $0x134] sm:%s1368] %v1467
                %v1469 = vld [vmem:[%s1375 + $0xb8] sm:%s1368]
                %1470 = vst [vmem:[%s1376 + $0x138] sm:%s1368] %v1469
                %v1471 = vld [vmem:[%s1375 + $0xbc] sm:%s1368]
                %1472 = vst [vmem:[%s1376 + $0x13c] sm:%s1368] %v1471
                %v1473 = vld [vmem:[%s1375 + $0xc0] sm:%s1368]
                %1474 = vst [vmem:[%s1376 + $0x180] sm:%s1368] %v1473
                %v1475 = vld [vmem:[%s1375 + $0xc4] sm:%s1368]
                %1476 = vst [vmem:[%s1376 + $0x184] sm:%s1368] %v1475
                %v1477 = vld [vmem:[%s1375 + $0xc8] sm:%s1368]
                %1478 = vst [vmem:[%s1376 + $0x188] sm:%s1368] %v1477
                %v1479 = vld [vmem:[%s1375 + $0xcc] sm:%s1368]
                %1480 = vst [vmem:[%s1376 + $0x18c] sm:%s1368] %v1479
                %v1481 = vld [vmem:[%s1375 + $0xd0] sm:%s1368]
                %1482 = vst [vmem:[%s1376 + $0x190] sm:%s1368] %v1481
                %v1483 = vld [vmem:[%s1375 + $0xd4] sm:%s1368]
                %1484 = vst [vmem:[%s1376 + $0x194] sm:%s1368] %v1483
                %v1485 = vld [vmem:[%s1375 + $0xd8] sm:%s1368]
                %1486 = vst [vmem:[%s1376 + $0x198] sm:%s1368] %v1485
                %v1487 = vld [vmem:[%s1375 + $0xdc] sm:%s1368]
                %1488 = vst [vmem:[%s1376 + $0x19c] sm:%s1368] %v1487
                %v1489 = vld [vmem:[%s1375 + $0xe0] sm:%s1368]
                %1490 = vst [vmem:[%s1376 + $0x1a0] sm:%s1368] %v1489
                %v1491 = vld [vmem:[%s1375 + $0xe4] sm:%s1368]
                %1492 = vst [vmem:[%s1376 + $0x1a4] sm:%s1368] %v1491
                %v1493 = vld [vmem:[%s1375 + $0xe8] sm:%s1368]
                %1494 = vst [vmem:[%s1376 + $0x1a8] sm:%s1368] %v1493
                %v1495 = vld [vmem:[%s1375 + $0xec] sm:%s1368]
                %1496 = vst [vmem:[%s1376 + $0x1ac] sm:%s1368] %v1495
                %v1497 = vld [vmem:[%s1375 + $0xf0] sm:%s1368]
                %1498 = vst [vmem:[%s1376 + $0x1b0] sm:%s1368] %v1497
                %v1499 = vld [vmem:[%s1375 + $0xf4] sm:%s1368]
                %1500 = vst [vmem:[%s1376 + $0x1b4] sm:%s1368] %v1499
                %v1501 = vld [vmem:[%s1375 + $0xf8] sm:%s1368]
                %1502 = vst [vmem:[%s1376 + $0x1b8] sm:%s1368] %v1501
                %v1503 = vld [vmem:[%s1375 + $0xfc] sm:%s1368]
                %1504 = vst [vmem:[%s1376 + $0x1bc] sm:%s1368] %v1503
              $region69: #{tpu_custom_call.1} parent=63 // loop_footer
                %s1374 = sadd.s32 1, %s1370
              $region70: #{tpu_custom_call.1} parent=63 // loop_footer_branch
                %1369 = sbr.rel target = $region66
              $region71: #{tpu_custom_call.1} parent=63 // loop_exit
                _
            $region64: #{tpu_custom_call.1} parent=55 // pred_fallthru
              _
          $region56: #{tpu_custom_call.1} parent=51 // pred_fallthru
            _
          %1653 = vnop
        $region52: #{tpu_custom_call.1} parent=39 // pred_fallthru
          _
      $region40: #{tpu_custom_call.1} parent=5 // pred_fallthru
        _
      %p1654 = scmp.le.s32.totalorder 2, %s17
      // Predicated region
      $region90: #{tpu_custom_call.1} parent=5 // pred_check
        %p1655 = pneg %p1654
      $region91: #{tpu_custom_call.1} parent=5 // pred_check_branch
        %1657 = sbr.rel (%p1655) target = $region93
      $region92: #{tpu_custom_call.1} parent=5 // pred_region
        %s1658 = ssub.s32 %s17, 2
        // Predicated region
        $region94: #{tpu_custom_call.1} parent=92 // pred_check
          %p1659 = pneg %p172
        $region95: #{tpu_custom_call.1} parent=92 // pred_check_branch
          %1661 = sbr.rel (%p1659) target = $region97
        $region96: #{tpu_custom_call.1} parent=92 // pred_region
          %s1662 = smul.u32 16, %s29
          %p1663 = scmp.lt.s32.totalorder %s28, 1
          %s1664 = scalar_select %p1663, %s28, 1
          %p1665 = scmp.lt.s32.totalorder %s1662, 31
          %s1666 = scalar_select %p1665, %s1662, 31
          %s1667 = smul.addr %s1664, 32
          %s1668 = sadd.s32 %s1666, %s1667
          %s1669 = smul.addr %s1668, 4
          %s1670 = scalar_lea.vmem %s5, %s1669
        $region97: #{tpu_custom_call.1} parent=92 // pred_fallthru
          _
        // Predicated region
        $region98: #{tpu_custom_call.1} parent=92 // pred_check
          %p1671 = pneg %p200
        $region99: #{tpu_custom_call.1} parent=92 // pred_check_branch
          %1673 = sbr.rel (%p1671) target = $region101
        $region100: #{tpu_custom_call.1} parent=92 // pred_region
          %s1674 = sand.u32 %s185, 1
          %s1675 = scalar_lea.sflag [#allocation3], %s1674
          %s1676 = sand.u32 %s185, 1
          %s1677 = smul.addr %s1676, 32
          %s1678 = scalar_lea.vmem [#allocation2], %s1677
          %1679 = dma.done %s1675, 512
        $region101: #{tpu_custom_call.1} parent=92 // pred_fallthru
          _
        // Predicated region
        $region102: #{tpu_custom_call.1} parent=92 // pred_check
          %p1680 = pneg %p228
        $region103: #{tpu_custom_call.1} parent=92 // pred_check_branch
          %1682 = sbr.rel (%p1680) target = $region105
        $region104: #{tpu_custom_call.1} parent=92 // pred_region
          %s1683 = sand.u32 %s213, 1
          %s1684 = sand.u32 %s213, 1
          %s1685 = smul.addr %s1684, 256
          %s1686 = scalar_lea.vmem [#allocation4], %s1685
        $region105: #{tpu_custom_call.1} parent=92 // pred_fallthru
          _
      $region93: #{tpu_custom_call.1} parent=5 // pred_fallthru
        _
    $region6: #{tpu_custom_call.1} parent=1 // loop_footer
      %s21 = sadd.s32 1, %s17
    $region7: #{tpu_custom_call.1} parent=1 // loop_footer_branch
      %16 = sbr.rel target = $region3
    $region8: #{tpu_custom_call.1} parent=1 // loop_exit
      _
    %1687 = vsyncpa [#allocation3], 1
    %s1688 = scalar_lea.sflag [#allocation3], 1
    %1689 = vsyncpa %s1688, 1

</llo_original>
